<compile_context>
chip_gen: v7x
topology: tpu7x:2x2x1
jax: 0.10.0
libtpu: 0.0.40
codegen_flags: <defaults>
</compile_context>

<pallas_src>
import math

import numpy as np
import jax
import jax.numpy as jnp
from jax.experimental import pallas as pl
from jax.experimental.pallas import tpu as pltpu

# ----------------------------- configuration -------------------------------
B = 2            # batch
TQ = 8           # decoder (causal_output) sequence length
TK = 16          # encoder sequence length (unused by the effective math)
C = 64           # n_dim
H = 4            # n_head
DH = C // H      # head dim = 16
HID = 4 * C      # SwiGLU hidden = 256
L = 1            # n_dec_layer
EPS = 1e-6
ROPE_BASE = 10000.0
NEG_INF = -1e30


# ------------------------------ Pallas kernel ------------------------------
def _rmsnorm(v, g):
    ms = jnp.mean(v * v, axis=-1, keepdims=True)
    return v * jax.lax.rsqrt(ms + EPS) * g


def decoder_kernel(x_ref, mask_ref, cos2_ref, sin2_ref,
                   wqkv_ref, wp_ref, g1_ref, g2_ref, g3_ref,
                   w13_ref, w2_ref, gout_ref, o_ref):
    """Single invocation: all B*T tokens processed at once (flattened rows)."""
    x = x_ref[...].astype(jnp.float32)           # (N, C), N = B*T, row = b*T+t
    mask_add = mask_ref[...]                     # (N, N) additive 0 / -1e30
    cos2 = cos2_ref[...]                         # (N, 2C)  cos tiled over q|k
    sin2 = sin2_ref[...]                         # (N, 2C)  sin tiled over q|k

    scale = 1.0 / math.sqrt(DH)

    for l in range(L):                           # static unroll over layers
        wqkv = wqkv_ref[l]                       # (C, 5C): q | k | q@P | k@P | v
        wp = wp_ref[l]                           # (C, C)
        g1, g2, g3 = g1_ref[l], g2_ref[l], g3_ref[l]
        w13 = w13_ref[l]                         # (C, 2*HID)
        w2 = w2_ref[l]                           # (HID, C)

        # --- self attention (pre-norm); RoPE rotation folded into wqkv ---
        xn = _rmsnorm(x, g1)
        qkv = jnp.dot(xn, wqkv, preferred_element_type=jnp.float32)   # (N, 5C)
        qk = qkv[:, :2 * C] * cos2 + qkv[:, 2 * C:4 * C] * sin2       # RoPE'd q|k
        v = qkv[:, 4 * C:]

        y = jnp.zeros_like(x)
        for h in range(H):                        # static unroll over heads
            qh = qk[:, h * DH:(h + 1) * DH]
            kh = qk[:, C + h * DH:C + (h + 1) * DH]
            vh = v[:, h * DH:(h + 1) * DH]
            s = jnp.dot(qh, kh.T, preferred_element_type=jnp.float32) * scale
            s = s + mask_add
            m = jnp.max(s, axis=-1, keepdims=True)
            p = jnp.exp(s - m)
            p = p * pl.reciprocal(jnp.sum(p, axis=-1, keepdims=True), approx=True)
            oh = jnp.dot(p, vh, preferred_element_type=jnp.float32)
            # accumulate straight into Wp-space: no lane-axis head concatenate
            y = y + jnp.dot(oh, wp[h * DH:(h + 1) * DH, :],
                            preferred_element_type=jnp.float32)

        x = xn + y                                # residual onto normed x (ref quirk)
        x = _rmsnorm(x, g2)                       # rmsnorm_2 (non-residual)

        # --- SwiGLU FFN with its own pre-norm (W1|W3 fused) ---
        xm = _rmsnorm(x, g3)
        h13 = jnp.dot(xm, w13, preferred_element_type=jnp.float32)    # (N, 2*HID)
        h1, h3 = h13[:, :HID], h13[:, HID:]
        x = x + jnp.dot((h1 * jax.nn.sigmoid(h1)) * h3, w2,
                        preferred_element_type=jnp.float32)

    x = _rmsnorm(x, gout_ref[...])                # decoder-level rms_out

    # lane-dense (T, B*C) output slab -> unmasked stores; wrapper untangles.
    t_len, bc = o_ref.shape
    nb = bc // x.shape[-1]
    o_ref[...] = jnp.concatenate(
        [x[b * t_len:(b + 1) * t_len, :] for b in range(nb)],
        axis=-1).astype(o_ref.dtype)


# ------------------------------- wrapper ------------------------------------
def _rope_tables(T, dh, n_head, base=ROPE_BASE):
    pos = np.arange(T, dtype=np.float64)
    inv_freq = 1.0 / (base ** (np.arange(0, dh, 2, dtype=np.float64) / dh))
    ang = pos[:, None] * inv_freq[None, :]                   # (T, dh/2)
    cos = np.repeat(np.cos(ang), 2, axis=-1)                 # (T, dh) interleaved
    sin = np.repeat(np.sin(ang), 2, axis=-1)
    return (np.tile(cos, (1, n_head)).astype(np.float32),    # (T, C)
            np.tile(sin, (1, n_head)).astype(np.float32))


def _pair_rotation_matrix(c):
    # (x @ P)[:, 2i] = -x[:, 2i+1];  (x @ P)[:, 2i+1] = x[:, 2i]
    P = np.zeros((c, c), np.float32)
    for e in range(0, c, 2):
        P[e + 1, e] = -1.0
        P[e, e + 1] = 1.0
    return P


@jax.jit
def decoder_forward(params, enc_out, x, enc_mask, dec_mask):
    """Pallas-backed Decoder.forward. enc_out / enc_mask accepted but unused
    (the reference discards the cross-attention output)."""
    del enc_out, enc_mask
    Bx, T, Cx = x.shape
    N = Bx * T

    # RoPE tables: positions 0..T-1, tiled over the q|k lane slab and over batch
    cosC, sinC = _rope_tables(T, DH, H)                              # (T, C)
    cos2 = np.tile(np.concatenate([cosC, cosC], axis=-1), (Bx, 1))   # (N, 2C)
    sin2 = np.tile(np.concatenate([sinC, sinC], axis=-1), (Bx, 1))

    # additive block-diagonal (over batch) causal mask for flattened tokens
    m = dec_mask[:, 0].astype(jnp.float32)                           # (B, T, T)
    beye = jnp.eye(Bx, dtype=jnp.float32)
    big = jnp.einsum('bc,bqk->bqck', beye, m).reshape(N, N)
    mask_add = jnp.where(big > 0, 0.0, NEG_INF).astype(jnp.float32)

    # fused projections; RoPE pair-rotation folded into extra weight columns
    pmat = _pair_rotation_matrix(Cx)
    wq, wk, wv, wp = params["wq"], params["wk"], params["wv"], params["wp"]
    wqkv = jnp.concatenate([wq, wk, wq @ pmat, wk @ pmat, wv], axis=-1)  # (L,C,5C)
    w13 = jnp.concatenate([params["w1"], params["w3"]], axis=-1)         # (L,C,2H)

    out = pl.pallas_call(
        decoder_kernel,
        out_shape=jax.ShapeDtypeStruct((T, Bx * Cx), jnp.float32),
        compiler_params=pltpu.CompilerParams(vmem_limit_bytes=32 * 1024 * 1024),
    )(x.reshape(N, Cx).astype(jnp.float32), mask_add,
      jnp.asarray(cos2), jnp.asarray(sin2),
      wqkv, wp, params["g1"], params["g2"], params["g3"],
      w13, params["w2"], params["gout"])

    # (T, B*C) slab -> (B, T, C)
    return out.reshape(T, Bx, Cx).transpose(1, 0, 2)


# --------------------------- pure-JAX reference ------------------------------
def decoder_reference(params, x, dec_mask):
    cosC, sinC = _rope_tables(x.shape[1], DH, H)
    pmat = _pair_rotation_matrix(x.shape[2])
    mask = dec_mask[:, 0]                                     # (B, T, T) bool
    scale = 1.0 / math.sqrt(DH)

    def rms(v, g):
        return v * jax.lax.rsqrt(jnp.mean(v * v, -1, keepdims=True) + EPS) * g

    x = x.astype(jnp.float32)
    for l in range(L):
        wq, wk, wv, wp = (params[n][l] for n in ("wq", "wk", "wv", "wp"))
        g1, g2, g3 = (params[n][l] for n in ("g1", "g2", "g3"))
        w1, w3, w2 = (params[n][l] for n in ("w1", "w3", "w2"))
        xn = rms(x, g1)
        q, k, v = xn @ wq, xn @ wk, xn @ wv
        q = q * cosC + (q @ pmat) * sinC
        k = k * cosC + (k @ pmat) * sinC
        qh = q.reshape(B, TQ, H, DH).transpose(0, 2, 1, 3)
        kh = k.reshape(B, TQ, H, DH).transpose(0, 2, 1, 3)
        vh = v.reshape(B, TQ, H, DH).transpose(0, 2, 1, 3)
        s = jnp.einsum("bhqd,bhkd->bhqk", qh, kh) * scale
        s = jnp.where(mask[:, None], s, -jnp.inf)
        p = jax.nn.softmax(s, axis=-1)
        o = jnp.einsum("bhqk,bhkd->bhqd", p, vh)
        attn = o.transpose(0, 2, 1, 3).reshape(B, TQ, C)
        x = xn + attn @ wp
        x = rms(x, g2)
        xm = rms(x, g3)
        x = x + ((jax.nn.silu(xm @ w1)) * (xm @ w3)) @ w2
    return rms(x, params["gout"])


# --------------------------------- main --------------------------------------
if __name__ == "__main__":
    key = jax.random.PRNGKey(0)
    ks = jax.random.split(key, 16)

    def w(k, shape, scale=0.02):
        return (scale * jax.random.normal(k, shape)).astype(jnp.float32)

    params = {
        "wq": w(ks[0], (L, C, C)),
        "wk": w(ks[1], (L, C, C)),
        "wv": w(ks[2], (L, C, C)),
        "wp": w(ks[3], (L, C, C)),
        "w1": w(ks[4], (L, C, HID)),
        "w3": w(ks[5], (L, C, HID)),
        "w2": w(ks[6], (L, HID, C)),
        "g1": jnp.ones((L, 1, C), jnp.float32),
        "g2": jnp.ones((L, 1, C), jnp.float32),
        "g3": jnp.ones((L, 1, C), jnp.float32),
        "gout": jnp.ones((1, C), jnp.float32),
    }

    # inputs mirroring Decoder.forward(enc_out, x, enc_mask, dec_mask)
    enc_out = jax.random.normal(ks[7], (B, TK, C), jnp.float32)   # unused (dead code in ref)
    x = jax.random.normal(ks[8], (B, TQ, C), jnp.float32)
    enc_mask = jnp.ones((B, 1, TQ, TK), jnp.bool_)                # unused (dead code in ref)
    dec_mask = jnp.tril(jnp.ones((B, TQ, TQ), jnp.bool_))[:, None]

    out = decoder_forward(params, enc_out, x, enc_mask, dec_mask)
    out = jax.block_until_ready(out)

    ref = decoder_reference(params, x, dec_mask)
    np.testing.assert_allclose(np.asarray(out), np.asarray(ref), rtol=2e-3, atol=2e-3)

    print("KERNEL_OK")
</pallas_src>

<mosaic_0001>
module attributes {stable_mosaic.version = 11 : i64} {
  func.func @decoder_kernel(%arg0: memref<16x64xf32, #tpu.memory_space<vmem>>, %arg1: memref<16x16xf32, #tpu.memory_space<vmem>>, %arg2: memref<16x128xf32, #tpu.memory_space<vmem>>, %arg3: memref<16x128xf32, #tpu.memory_space<vmem>>, %arg4: memref<1x64x320xf32, #tpu.memory_space<vmem>>, %arg5: memref<1x64x64xf32, #tpu.memory_space<vmem>>, %arg6: memref<1x1x64xf32, #tpu.memory_space<vmem>>, %arg7: memref<1x1x64xf32, #tpu.memory_space<vmem>>, %arg8: memref<1x1x64xf32, #tpu.memory_space<vmem>>, %arg9: memref<1x64x512xf32, #tpu.memory_space<vmem>>, %arg10: memref<1x256x64xf32, #tpu.memory_space<vmem>>, %arg11: memref<1x64xf32, #tpu.memory_space<vmem>>, %arg12: memref<8x128xf32, #tpu.memory_space<vmem>>) attributes {dimension_semantics = [], scalar_prefetch = 0 : i64, scratch_operands = 0 : i64, tpu.core_type = #tpu.core_type<tc>} {
    %c0 = arith.constant 0 : index
    %c0_0 = arith.constant 0 : index
    %0 = vector.load %arg0[%c0, %c0_0] : memref<16x64xf32, #tpu.memory_space<vmem>>, vector<16x64xf32>
    %c0_1 = arith.constant 0 : index
    %c0_2 = arith.constant 0 : index
    %1 = vector.load %arg1[%c0_1, %c0_2] : memref<16x16xf32, #tpu.memory_space<vmem>>, vector<16x16xf32>
    %c0_3 = arith.constant 0 : index
    %c0_4 = arith.constant 0 : index
    %2 = vector.load %arg2[%c0_3, %c0_4] : memref<16x128xf32, #tpu.memory_space<vmem>>, vector<16x128xf32>
    %c0_5 = arith.constant 0 : index
    %c0_6 = arith.constant 0 : index
    %3 = vector.load %arg3[%c0_5, %c0_6] : memref<16x128xf32, #tpu.memory_space<vmem>>, vector<16x128xf32>
    %c0_7 = arith.constant 0 : index
    %c0_8 = arith.constant 0 : index
    %c0_9 = arith.constant 0 : index
    %4 = vector.load %arg4[%c0_7, %c0_8, %c0_9] : memref<1x64x320xf32, #tpu.memory_space<vmem>>, vector<1x64x320xf32>
    %5 = vector.shape_cast %4 : vector<1x64x320xf32> to vector<64x320xf32>
    %c0_10 = arith.constant 0 : index
    %c0_11 = arith.constant 0 : index
    %c0_12 = arith.constant 0 : index
    %6 = vector.load %arg5[%c0_10, %c0_11, %c0_12] : memref<1x64x64xf32, #tpu.memory_space<vmem>>, vector<1x64x64xf32>
    %7 = vector.shape_cast %6 : vector<1x64x64xf32> to vector<64x64xf32>
    %c0_13 = arith.constant 0 : index
    %c0_14 = arith.constant 0 : index
    %c0_15 = arith.constant 0 : index
    %8 = vector.load %arg6[%c0_13, %c0_14, %c0_15] : memref<1x1x64xf32, #tpu.memory_space<vmem>>, vector<1x1x64xf32>
    %9 = vector.shape_cast %8 : vector<1x1x64xf32> to vector<1x64xf32>
    %c0_16 = arith.constant 0 : index
    %c0_17 = arith.constant 0 : index
    %c0_18 = arith.constant 0 : index
    %10 = vector.load %arg7[%c0_16, %c0_17, %c0_18] : memref<1x1x64xf32, #tpu.memory_space<vmem>>, vector<1x1x64xf32>
    %11 = vector.shape_cast %10 : vector<1x1x64xf32> to vector<1x64xf32>
    %c0_19 = arith.constant 0 : index
    %c0_20 = arith.constant 0 : index
    %c0_21 = arith.constant 0 : index
    %12 = vector.load %arg8[%c0_19, %c0_20, %c0_21] : memref<1x1x64xf32, #tpu.memory_space<vmem>>, vector<1x1x64xf32>
    %13 = vector.shape_cast %12 : vector<1x1x64xf32> to vector<1x64xf32>
    %c0_22 = arith.constant 0 : index
    %c0_23 = arith.constant 0 : index
    %c0_24 = arith.constant 0 : index
    %14 = vector.load %arg9[%c0_22, %c0_23, %c0_24] : memref<1x64x512xf32, #tpu.memory_space<vmem>>, vector<1x64x512xf32>
    %15 = vector.shape_cast %14 : vector<1x64x512xf32> to vector<64x512xf32>
    %c0_25 = arith.constant 0 : index
    %c0_26 = arith.constant 0 : index
    %c0_27 = arith.constant 0 : index
    %16 = vector.load %arg10[%c0_25, %c0_26, %c0_27] : memref<1x256x64xf32, #tpu.memory_space<vmem>>, vector<1x256x64xf32>
    %17 = vector.shape_cast %16 : vector<1x256x64xf32> to vector<256x64xf32>
    %18 = arith.mulf %0, %0 : vector<16x64xf32>
    %cst = arith.constant dense<0.000000e+00> : vector<16xf32>
    %19 = vector.multi_reduction <add>, %18, %cst [1] : vector<16x64xf32> to vector<16xf32>
    %20 = vector.shape_cast %19 : vector<16xf32> to vector<16x1xf32>
    %cst_28 = arith.constant 6.400000e+01 : f32
    %21 = vector.broadcast %cst_28 : f32 to vector<16x1xf32>
    %22 = arith.divf %20, %21 : vector<16x1xf32>
    %cst_29 = arith.constant 9.99999997E-7 : f32
    %23 = vector.broadcast %cst_29 : f32 to vector<16x1xf32>
    %24 = arith.addf %22, %23 : vector<16x1xf32>
    %25 = math.rsqrt %24 : vector<16x1xf32>
    %26 = vector.broadcast %25 : vector<16x1xf32> to vector<16x64xf32>
    %27 = arith.mulf %0, %26 : vector<16x64xf32>
    %28 = vector.broadcast %9 : vector<1x64xf32> to vector<16x64xf32>
    %29 = arith.mulf %27, %28 : vector<16x64xf32>
    %cst_30 = arith.constant dense<0.000000e+00> : vector<16x320xf32>
    %30 = tpu.matmul %29, %5, %cst_30 {dimension_numbers = #tpu.dot_dimension_numbers<[1], [0], [0], [1], [0, 0, 1, 1], [], []>} : vector<16x64xf32>, vector<64x320xf32>, vector<16x320xf32> -> vector<16x320xf32>
    %31 = vector.extract_strided_slice %30 {offsets = [0, 0], sizes = [16, 128], strides = [1, 1]} : vector<16x320xf32> to vector<16x128xf32>
    %32 = arith.mulf %31, %2 : vector<16x128xf32>
    %33 = vector.extract_strided_slice %30 {offsets = [0, 128], sizes = [16, 128], strides = [1, 1]} : vector<16x320xf32> to vector<16x128xf32>
    %34 = arith.mulf %33, %3 : vector<16x128xf32>
    %35 = arith.addf %32, %34 : vector<16x128xf32>
    %36 = vector.extract_strided_slice %30 {offsets = [0, 256], sizes = [16, 64], strides = [1, 1]} : vector<16x320xf32> to vector<16x64xf32>
    %cst_31 = arith.constant 0.000000e+00 : f32
    %37 = vector.broadcast %cst_31 : f32 to vector<16x64xf32>
    %38 = vector.extract_strided_slice %35 {offsets = [0, 0], sizes = [16, 16], strides = [1, 1]} : vector<16x128xf32> to vector<16x16xf32>
    %39 = vector.extract_strided_slice %35 {offsets = [0, 64], sizes = [16, 16], strides = [1, 1]} : vector<16x128xf32> to vector<16x16xf32>
    %40 = vector.extract_strided_slice %36 {offsets = [0, 0], sizes = [16, 16], strides = [1, 1]} : vector<16x64xf32> to vector<16x16xf32>
    %41 = tpu.transpose %39, [1, 0] : vector<16x16xf32> -> vector<16x16xf32>
    %cst_32 = arith.constant dense<0.000000e+00> : vector<16x16xf32>
    %42 = tpu.matmul %38, %41, %cst_32 {dimension_numbers = #tpu.dot_dimension_numbers<[1], [0], [0], [1], [0, 0, 1, 1], [], []>} : vector<16x16xf32>, vector<16x16xf32>, vector<16x16xf32> -> vector<16x16xf32>
    %cst_33 = arith.constant 2.500000e-01 : f32
    %43 = vector.broadcast %cst_33 : f32 to vector<16x16xf32>
    %44 = arith.mulf %42, %43 : vector<16x16xf32>
    %45 = arith.addf %44, %1 : vector<16x16xf32>
    %cst_34 = arith.constant dense<0xFF800000> : vector<16xf32>
    %46 = vector.multi_reduction <maximumf>, %45, %cst_34 [1] : vector<16x16xf32> to vector<16xf32>
    %47 = vector.shape_cast %46 : vector<16xf32> to vector<16x1xf32>
    %48 = vector.broadcast %47 : vector<16x1xf32> to vector<16x16xf32>
    %49 = arith.subf %45, %48 : vector<16x16xf32>
    %50 = math.exp %49 : vector<16x16xf32>
    %cst_35 = arith.constant dense<0.000000e+00> : vector<16xf32>
    %51 = vector.multi_reduction <add>, %50, %cst_35 [1] : vector<16x16xf32> to vector<16xf32>
    %52 = vector.shape_cast %51 : vector<16xf32> to vector<16x1xf32>
    %53 = tpu.reciprocal %52 {approx = true} : vector<16x1xf32> -> vector<16x1xf32>
    %54 = vector.broadcast %53 : vector<16x1xf32> to vector<16x16xf32>
    %55 = arith.mulf %50, %54 : vector<16x16xf32>
    %cst_36 = arith.constant dense<0.000000e+00> : vector<16x16xf32>
    %56 = tpu.matmul %55, %40, %cst_36 {dimension_numbers = #tpu.dot_dimension_numbers<[1], [0], [0], [1], [0, 0, 1, 1], [], []>} : vector<16x16xf32>, vector<16x16xf32>, vector<16x16xf32> -> vector<16x16xf32>
    %57 = vector.extract_strided_slice %7 {offsets = [0, 0], sizes = [16, 64], strides = [1, 1]} : vector<64x64xf32> to vector<16x64xf32>
    %cst_37 = arith.constant dense<0.000000e+00> : vector<16x64xf32>
    %58 = tpu.matmul %56, %57, %cst_37 {dimension_numbers = #tpu.dot_dimension_numbers<[1], [0], [0], [1], [0, 0, 1, 1], [], []>} : vector<16x16xf32>, vector<16x64xf32>, vector<16x64xf32> -> vector<16x64xf32>
    %59 = arith.addf %37, %58 : vector<16x64xf32>
    %60 = vector.extract_strided_slice %35 {offsets = [0, 16], sizes = [16, 16], strides = [1, 1]} : vector<16x128xf32> to vector<16x16xf32>
    %61 = vector.extract_strided_slice %35 {offsets = [0, 80], sizes = [16, 16], strides = [1, 1]} : vector<16x128xf32> to vector<16x16xf32>
    %62 = vector.extract_strided_slice %36 {offsets = [0, 16], sizes = [16, 16], strides = [1, 1]} : vector<16x64xf32> to vector<16x16xf32>
    %63 = tpu.transpose %61, [1, 0] : vector<16x16xf32> -> vector<16x16xf32>
    %cst_38 = arith.constant dense<0.000000e+00> : vector<16x16xf32>
    %64 = tpu.matmul %60, %63, %cst_38 {dimension_numbers = #tpu.dot_dimension_numbers<[1], [0], [0], [1], [0, 0, 1, 1], [], []>} : vector<16x16xf32>, vector<16x16xf32>, vector<16x16xf32> -> vector<16x16xf32>
    %cst_39 = arith.constant 2.500000e-01 : f32
    %65 = vector.broadcast %cst_39 : f32 to vector<16x16xf32>
    %66 = arith.mulf %64, %65 : vector<16x16xf32>
    %67 = arith.addf %66, %1 : vector<16x16xf32>
    %cst_40 = arith.constant dense<0xFF800000> : vector<16xf32>
    %68 = vector.multi_reduction <maximumf>, %67, %cst_40 [1] : vector<16x16xf32> to vector<16xf32>
    %69 = vector.shape_cast %68 : vector<16xf32> to vector<16x1xf32>
    %70 = vector.broadcast %69 : vector<16x1xf32> to vector<16x16xf32>
    %71 = arith.subf %67, %70 : vector<16x16xf32>
    %72 = math.exp %71 : vector<16x16xf32>
    %cst_41 = arith.constant dense<0.000000e+00> : vector<16xf32>
    %73 = vector.multi_reduction <add>, %72, %cst_41 [1] : vector<16x16xf32> to vector<16xf32>
    %74 = vector.shape_cast %73 : vector<16xf32> to vector<16x1xf32>
    %75 = tpu.reciprocal %74 {approx = true} : vector<16x1xf32> -> vector<16x1xf32>
    %76 = vector.broadcast %75 : vector<16x1xf32> to vector<16x16xf32>
    %77 = arith.mulf %72, %76 : vector<16x16xf32>
    %cst_42 = arith.constant dense<0.000000e+00> : vector<16x16xf32>
    %78 = tpu.matmul %77, %62, %cst_42 {dimension_numbers = #tpu.dot_dimension_numbers<[1], [0], [0], [1], [0, 0, 1, 1], [], []>} : vector<16x16xf32>, vector<16x16xf32>, vector<16x16xf32> -> vector<16x16xf32>
    %79 = vector.extract_strided_slice %7 {offsets = [16, 0], sizes = [16, 64], strides = [1, 1]} : vector<64x64xf32> to vector<16x64xf32>
    %cst_43 = arith.constant dense<0.000000e+00> : vector<16x64xf32>
    %80 = tpu.matmul %78, %79, %cst_43 {dimension_numbers = #tpu.dot_dimension_numbers<[1], [0], [0], [1], [0, 0, 1, 1], [], []>} : vector<16x16xf32>, vector<16x64xf32>, vector<16x64xf32> -> vector<16x64xf32>
    %81 = arith.addf %59, %80 : vector<16x64xf32>
    %82 = vector.extract_strided_slice %35 {offsets = [0, 32], sizes = [16, 16], strides = [1, 1]} : vector<16x128xf32> to vector<16x16xf32>
    %83 = vector.extract_strided_slice %35 {offsets = [0, 96], sizes = [16, 16], strides = [1, 1]} : vector<16x128xf32> to vector<16x16xf32>
    %84 = vector.extract_strided_slice %36 {offsets = [0, 32], sizes = [16, 16], strides = [1, 1]} : vector<16x64xf32> to vector<16x16xf32>
    %85 = tpu.transpose %83, [1, 0] : vector<16x16xf32> -> vector<16x16xf32>
    %cst_44 = arith.constant dense<0.000000e+00> : vector<16x16xf32>
    %86 = tpu.matmul %82, %85, %cst_44 {dimension_numbers = #tpu.dot_dimension_numbers<[1], [0], [0], [1], [0, 0, 1, 1], [], []>} : vector<16x16xf32>, vector<16x16xf32>, vector<16x16xf32> -> vector<16x16xf32>
    %cst_45 = arith.constant 2.500000e-01 : f32
    %87 = vector.broadcast %cst_45 : f32 to vector<16x16xf32>
    %88 = arith.mulf %86, %87 : vector<16x16xf32>
    %89 = arith.addf %88, %1 : vector<16x16xf32>
    %cst_46 = arith.constant dense<0xFF800000> : vector<16xf32>
    %90 = vector.multi_reduction <maximumf>, %89, %cst_46 [1] : vector<16x16xf32> to vector<16xf32>
    %91 = vector.shape_cast %90 : vector<16xf32> to vector<16x1xf32>
    %92 = vector.broadcast %91 : vector<16x1xf32> to vector<16x16xf32>
    %93 = arith.subf %89, %92 : vector<16x16xf32>
    %94 = math.exp %93 : vector<16x16xf32>
    %cst_47 = arith.constant dense<0.000000e+00> : vector<16xf32>
    %95 = vector.multi_reduction <add>, %94, %cst_47 [1] : vector<16x16xf32> to vector<16xf32>
    %96 = vector.shape_cast %95 : vector<16xf32> to vector<16x1xf32>
    %97 = tpu.reciprocal %96 {approx = true} : vector<16x1xf32> -> vector<16x1xf32>
    %98 = vector.broadcast %97 : vector<16x1xf32> to vector<16x16xf32>
    %99 = arith.mulf %94, %98 : vector<16x16xf32>
    %cst_48 = arith.constant dense<0.000000e+00> : vector<16x16xf32>
    %100 = tpu.matmul %99, %84, %cst_48 {dimension_numbers = #tpu.dot_dimension_numbers<[1], [0], [0], [1], [0, 0, 1, 1], [], []>} : vector<16x16xf32>, vector<16x16xf32>, vector<16x16xf32> -> vector<16x16xf32>
    %101 = vector.extract_strided_slice %7 {offsets = [32, 0], sizes = [16, 64], strides = [1, 1]} : vector<64x64xf32> to vector<16x64xf32>
    %cst_49 = arith.constant dense<0.000000e+00> : vector<16x64xf32>
    %102 = tpu.matmul %100, %101, %cst_49 {dimension_numbers = #tpu.dot_dimension_numbers<[1], [0], [0], [1], [0, 0, 1, 1], [], []>} : vector<16x16xf32>, vector<16x64xf32>, vector<16x64xf32> -> vector<16x64xf32>
    %103 = arith.addf %81, %102 : vector<16x64xf32>
    %104 = vector.extract_strided_slice %35 {offsets = [0, 48], sizes = [16, 16], strides = [1, 1]} : vector<16x128xf32> to vector<16x16xf32>
    %105 = vector.extract_strided_slice %35 {offsets = [0, 112], sizes = [16, 16], strides = [1, 1]} : vector<16x128xf32> to vector<16x16xf32>
    %106 = vector.extract_strided_slice %36 {offsets = [0, 48], sizes = [16, 16], strides = [1, 1]} : vector<16x64xf32> to vector<16x16xf32>
    %107 = tpu.transpose %105, [1, 0] : vector<16x16xf32> -> vector<16x16xf32>
    %cst_50 = arith.constant dense<0.000000e+00> : vector<16x16xf32>
    %108 = tpu.matmul %104, %107, %cst_50 {dimension_numbers = #tpu.dot_dimension_numbers<[1], [0], [0], [1], [0, 0, 1, 1], [], []>} : vector<16x16xf32>, vector<16x16xf32>, vector<16x16xf32> -> vector<16x16xf32>
    %cst_51 = arith.constant 2.500000e-01 : f32
    %109 = vector.broadcast %cst_51 : f32 to vector<16x16xf32>
    %110 = arith.mulf %108, %109 : vector<16x16xf32>
    %111 = arith.addf %110, %1 : vector<16x16xf32>
    %cst_52 = arith.constant dense<0xFF800000> : vector<16xf32>
    %112 = vector.multi_reduction <maximumf>, %111, %cst_52 [1] : vector<16x16xf32> to vector<16xf32>
    %113 = vector.shape_cast %112 : vector<16xf32> to vector<16x1xf32>
    %114 = vector.broadcast %113 : vector<16x1xf32> to vector<16x16xf32>
    %115 = arith.subf %111, %114 : vector<16x16xf32>
    %116 = math.exp %115 : vector<16x16xf32>
    %cst_53 = arith.constant dense<0.000000e+00> : vector<16xf32>
    %117 = vector.multi_reduction <add>, %116, %cst_53 [1] : vector<16x16xf32> to vector<16xf32>
    %118 = vector.shape_cast %117 : vector<16xf32> to vector<16x1xf32>
    %119 = tpu.reciprocal %118 {approx = true} : vector<16x1xf32> -> vector<16x1xf32>
    %120 = vector.broadcast %119 : vector<16x1xf32> to vector<16x16xf32>
    %121 = arith.mulf %116, %120 : vector<16x16xf32>
    %cst_54 = arith.constant dense<0.000000e+00> : vector<16x16xf32>
    %122 = tpu.matmul %121, %106, %cst_54 {dimension_numbers = #tpu.dot_dimension_numbers<[1], [0], [0], [1], [0, 0, 1, 1], [], []>} : vector<16x16xf32>, vector<16x16xf32>, vector<16x16xf32> -> vector<16x16xf32>
    %123 = vector.extract_strided_slice %7 {offsets = [48, 0], sizes = [16, 64], strides = [1, 1]} : vector<64x64xf32> to vector<16x64xf32>
    %cst_55 = arith.constant dense<0.000000e+00> : vector<16x64xf32>
    %124 = tpu.matmul %122, %123, %cst_55 {dimension_numbers = #tpu.dot_dimension_numbers<[1], [0], [0], [1], [0, 0, 1, 1], [], []>} : vector<16x16xf32>, vector<16x64xf32>, vector<16x64xf32> -> vector<16x64xf32>
    %125 = arith.addf %103, %124 : vector<16x64xf32>
    %126 = arith.addf %29, %125 : vector<16x64xf32>
    %127 = arith.mulf %126, %126 : vector<16x64xf32>
    %cst_56 = arith.constant dense<0.000000e+00> : vector<16xf32>
    %128 = vector.multi_reduction <add>, %127, %cst_56 [1] : vector<16x64xf32> to vector<16xf32>
    %129 = vector.shape_cast %128 : vector<16xf32> to vector<16x1xf32>
    %cst_57 = arith.constant 6.400000e+01 : f32
    %130 = vector.broadcast %cst_57 : f32 to vector<16x1xf32>
    %131 = arith.divf %129, %130 : vector<16x1xf32>
    %cst_58 = arith.constant 9.99999997E-7 : f32
    %132 = vector.broadcast %cst_58 : f32 to vector<16x1xf32>
    %133 = arith.addf %131, %132 : vector<16x1xf32>
    %134 = math.rsqrt %133 : vector<16x1xf32>
    %135 = vector.broadcast %134 : vector<16x1xf32> to vector<16x64xf32>
    %136 = arith.mulf %126, %135 : vector<16x64xf32>
    %137 = vector.broadcast %11 : vector<1x64xf32> to vector<16x64xf32>
    %138 = arith.mulf %136, %137 : vector<16x64xf32>
    %139 = arith.mulf %138, %138 : vector<16x64xf32>
    %cst_59 = arith.constant dense<0.000000e+00> : vector<16xf32>
    %140 = vector.multi_reduction <add>, %139, %cst_59 [1] : vector<16x64xf32> to vector<16xf32>
    %141 = vector.shape_cast %140 : vector<16xf32> to vector<16x1xf32>
    %cst_60 = arith.constant 6.400000e+01 : f32
    %142 = vector.broadcast %cst_60 : f32 to vector<16x1xf32>
    %143 = arith.divf %141, %142 : vector<16x1xf32>
    %cst_61 = arith.constant 9.99999997E-7 : f32
    %144 = vector.broadcast %cst_61 : f32 to vector<16x1xf32>
    %145 = arith.addf %143, %144 : vector<16x1xf32>
    %146 = math.rsqrt %145 : vector<16x1xf32>
    %147 = vector.broadcast %146 : vector<16x1xf32> to vector<16x64xf32>
    %148 = arith.mulf %138, %147 : vector<16x64xf32>
    %149 = vector.broadcast %13 : vector<1x64xf32> to vector<16x64xf32>
    %150 = arith.mulf %148, %149 : vector<16x64xf32>
    %cst_62 = arith.constant dense<0.000000e+00> : vector<16x512xf32>
    %151 = tpu.matmul %150, %15, %cst_62 {dimension_numbers = #tpu.dot_dimension_numbers<[1], [0], [0], [1], [0, 0, 1, 1], [], []>} : vector<16x64xf32>, vector<64x512xf32>, vector<16x512xf32> -> vector<16x512xf32>
    %152 = vector.extract_strided_slice %151 {offsets = [0, 0], sizes = [16, 256], strides = [1, 1]} : vector<16x512xf32> to vector<16x256xf32>
    %153 = vector.extract_strided_slice %151 {offsets = [0, 256], sizes = [16, 256], strides = [1, 1]} : vector<16x512xf32> to vector<16x256xf32>
    %154 = arith.negf %152 : vector<16x256xf32>
    %155 = math.exp %154 : vector<16x256xf32>
    %cst_63 = arith.constant 1.000000e+00 : f32
    %156 = vector.broadcast %cst_63 : f32 to vector<16x256xf32>
    %157 = arith.addf %156, %155 : vector<16x256xf32>
    %158 = arith.divf %156, %157 : vector<16x256xf32>
    %159 = arith.mulf %152, %158 : vector<16x256xf32>
    %160 = arith.mulf %159, %153 : vector<16x256xf32>
    %cst_64 = arith.constant dense<0.000000e+00> : vector<16x64xf32>
    %161 = tpu.matmul %160, %17, %cst_64 {dimension_numbers = #tpu.dot_dimension_numbers<[1], [0], [0], [1], [0, 0, 1, 1], [], []>} : vector<16x256xf32>, vector<256x64xf32>, vector<16x64xf32> -> vector<16x64xf32>
    %162 = arith.addf %138, %161 : vector<16x64xf32>
    %c0_65 = arith.constant 0 : index
    %c0_66 = arith.constant 0 : index
    %163 = vector.load %arg11[%c0_65, %c0_66] : memref<1x64xf32, #tpu.memory_space<vmem>>, vector<1x64xf32>
    %164 = arith.mulf %162, %162 : vector<16x64xf32>
    %cst_67 = arith.constant dense<0.000000e+00> : vector<16xf32>
    %165 = vector.multi_reduction <add>, %164, %cst_67 [1] : vector<16x64xf32> to vector<16xf32>
    %166 = vector.shape_cast %165 : vector<16xf32> to vector<16x1xf32>
    %cst_68 = arith.constant 6.400000e+01 : f32
    %167 = vector.broadcast %cst_68 : f32 to vector<16x1xf32>
    %168 = arith.divf %166, %167 : vector<16x1xf32>
    %cst_69 = arith.constant 9.99999997E-7 : f32
    %169 = vector.broadcast %cst_69 : f32 to vector<16x1xf32>
    %170 = arith.addf %168, %169 : vector<16x1xf32>
    %171 = math.rsqrt %170 : vector<16x1xf32>
    %172 = vector.broadcast %171 : vector<16x1xf32> to vector<16x64xf32>
    %173 = arith.mulf %162, %172 : vector<16x64xf32>
    %174 = vector.broadcast %163 : vector<1x64xf32> to vector<16x64xf32>
    %175 = arith.mulf %173, %174 : vector<16x64xf32>
    %176 = vector.extract_strided_slice %175 {offsets = [0, 0], sizes = [8, 64], strides = [1, 1]} : vector<16x64xf32> to vector<8x64xf32>
    %177 = vector.extract_strided_slice %175 {offsets = [8, 0], sizes = [8, 64], strides = [1, 1]} : vector<16x64xf32> to vector<8x64xf32>
    %178 = tpu.concatenate %176, %177 in 1 : vector<8x64xf32>, vector<8x64xf32> -> vector<8x128xf32>
    %c0_70 = arith.constant 0 : index
    %c0_71 = arith.constant 0 : index
    %179 = vector.load %arg12[%c0_70, %c0_71] : memref<8x128xf32, #tpu.memory_space<vmem>>, vector<8x128xf32>
    tpu.vector_store %arg12[%c0_70, %c0_71], %178 {strides = array<i32>} : memref<8x128xf32, #tpu.memory_space<vmem>>, vector<8x128xf32>,
    return
  }
}

</mosaic_0001>

<llo_original>
// kernel: decoder_forward.1
$region0: #{decoder_forward.1}
  #allocation0 [shape = 'u32[]', space=smem, size = 0x4, offset = 0x4, fixed_abs, tag = 'smem constant byte address 0x4 - core index']
  #allocation1 [shape = 'u32[144,128]{1,0:T(1,128)}', space=vmem, size = 0x12000, scoped, tag = 'internal scratch']
  %s0 = inlined_call_operand.vmem [shape: f32[16,64], index: 0, kind: input, shape index: {}]
  %s1 = inlined_call_operand.vmem [shape: f32[16,16], index: 1, kind: input, shape index: {}]
  %s2 = inlined_call_operand.vmem [shape: f32[16,128], index: 2, kind: input, shape index: {}]
  %s3 = inlined_call_operand.vmem [shape: f32[16,128], index: 3, kind: input, shape index: {}]
  %s4 = inlined_call_operand.vmem [shape: f32[1,64,320], index: 4, kind: input, shape index: {}]
  %s5 = inlined_call_operand.vmem [shape: f32[1,64,64], index: 5, kind: input, shape index: {}]
  %s6 = inlined_call_operand.vmem [shape: f32[1,1,64], index: 6, kind: input, shape index: {}]
  %s7 = inlined_call_operand.vmem [shape: f32[1,1,64], index: 7, kind: input, shape index: {}]
  %s8 = inlined_call_operand.vmem [shape: f32[1,1,64], index: 8, kind: input, shape index: {}]
  %s9 = inlined_call_operand.vmem [shape: f32[1,64,512], index: 9, kind: input, shape index: {}]
  %s10 = inlined_call_operand.vmem [shape: f32[1,256,64], index: 10, kind: input, shape index: {}]
  %s11 = inlined_call_operand.vmem [shape: f32[1,64], index: 11, kind: input, shape index: {}]
  %s12 = inlined_call_operand.vmem [shape: f32[8,128], index: 12, kind: output, shape index: {}]
  %s13 = sld [smem:[#allocation0]]
  $region58: #{decoder_forward.1} parent=0
    _
  %s15 = ssub.s32 1, %s13
  %s16 = scalar_select 0, %s15, %s13
  // Predicated region
  $region2: #{decoder_forward.1} parent=0 // pred_check
    _
  $region3: #{decoder_forward.1} parent=0 // pred_check_branch
    %18 = sbr.rel (0) target = $region5
  $region4: #{decoder_forward.1} parent=0 // pred_region
    _
  $region5: #{decoder_forward.1} parent=0 // pred_fallthru
    _
  // Predicated region
  $region6: #{decoder_forward.1} parent=0 // pred_check
    _
  $region7: #{decoder_forward.1} parent=0 // pred_check_branch
    %20 = sbr.rel (0) target = $region9
  $region8: #{decoder_forward.1} parent=0 // pred_region
    _
  $region9: #{decoder_forward.1} parent=0 // pred_fallthru
    _
  // Predicated region
  $region10: #{decoder_forward.1} parent=0 // pred_check
    _
  $region11: #{decoder_forward.1} parent=0 // pred_check_branch
    %22 = sbr.rel (0) target = $region13
  $region12: #{decoder_forward.1} parent=0 // pred_region
    _
  $region13: #{decoder_forward.1} parent=0 // pred_fallthru
    _
  // Predicated region
  $region14: #{decoder_forward.1} parent=0 // pred_check
    _
  $region15: #{decoder_forward.1} parent=0 // pred_check_branch
    %24 = sbr.rel (0) target = $region17
  $region16: #{decoder_forward.1} parent=0 // pred_region
    _
  $region17: #{decoder_forward.1} parent=0 // pred_fallthru
    _
  // Predicated region
  $region18: #{decoder_forward.1} parent=0 // pred_check
    _
  $region19: #{decoder_forward.1} parent=0 // pred_check_branch
    %26 = sbr.rel (0) target = $region21
  $region20: #{decoder_forward.1} parent=0 // pred_region
    _
  $region21: #{decoder_forward.1} parent=0 // pred_fallthru
    _
  // Predicated region
  $region22: #{decoder_forward.1} parent=0 // pred_check
    _
  $region23: #{decoder_forward.1} parent=0 // pred_check_branch
    %28 = sbr.rel (0) target = $region25
  $region24: #{decoder_forward.1} parent=0 // pred_region
    _
  $region25: #{decoder_forward.1} parent=0 // pred_fallthru
    _
  // Predicated region
  $region26: #{decoder_forward.1} parent=0 // pred_check
    _
  $region27: #{decoder_forward.1} parent=0 // pred_check_branch
    %30 = sbr.rel (0) target = $region29
  $region28: #{decoder_forward.1} parent=0 // pred_region
    _
  $region29: #{decoder_forward.1} parent=0 // pred_fallthru
    _
  // Predicated region
  $region30: #{decoder_forward.1} parent=0 // pred_check
    _
  $region31: #{decoder_forward.1} parent=0 // pred_check_branch
    %32 = sbr.rel (0) target = $region33
  $region32: #{decoder_forward.1} parent=0 // pred_region
    _
  $region33: #{decoder_forward.1} parent=0 // pred_fallthru
    _
  // Predicated region
  $region34: #{decoder_forward.1} parent=0 // pred_check
    _
  $region35: #{decoder_forward.1} parent=0 // pred_check_branch
    %34 = sbr.rel (0) target = $region37
  $region36: #{decoder_forward.1} parent=0 // pred_region
    _
  $region37: #{decoder_forward.1} parent=0 // pred_fallthru
    _
  // Predicated region
  $region38: #{decoder_forward.1} parent=0 // pred_check
    _
  $region39: #{decoder_forward.1} parent=0 // pred_check_branch
    %36 = sbr.rel (0) target = $region41
  $region40: #{decoder_forward.1} parent=0 // pred_region
    _
  $region41: #{decoder_forward.1} parent=0 // pred_fallthru
    _
  // Predicated region
  $region42: #{decoder_forward.1} parent=0 // pred_check
    _
  $region43: #{decoder_forward.1} parent=0 // pred_check_branch
    %38 = sbr.rel (0) target = $region45
  $region44: #{decoder_forward.1} parent=0 // pred_region
    _
  $region45: #{decoder_forward.1} parent=0 // pred_fallthru
    _
  // Predicated region
  $region46: #{decoder_forward.1} parent=0 // pred_check
    _
  $region47: #{decoder_forward.1} parent=0 // pred_check_branch
    %40 = sbr.rel (0) target = $region49
  $region48: #{decoder_forward.1} parent=0 // pred_region
    _
  $region49: #{decoder_forward.1} parent=0 // pred_fallthru
    _
  %v41 = vld [vmem:[%s0] sm:$0xff]
  %v42 = vld [vmem:[%s0 + $0x8] sm:$0xff]
  %v43 = vld [vmem:[%s1] sm:$0xff]
  %v44 = vld [vmem:[%s1 + $0x8] sm:$0xff]
  %v45 = vld [vmem:[%s2] sm:$0xff]
  %v46 = vld [vmem:[%s2 + $0x8] sm:$0xff]
  %v47 = vld [vmem:[%s3] sm:$0xff]
  %v48 = vld [vmem:[%s3 + $0x8] sm:$0xff]
  %v49 = vld [vmem:[%s4] sm:$0xff]
  %v50 = vld [vmem:[%s4 + $0x8] sm:$0xff]
  %v51 = vld [vmem:[%s4 + $0x10] sm:$0xff]
  %v52 = vld [vmem:[%s4 + $0x18] sm:$0xff]
  %v53 = vld [vmem:[%s4 + $0x20] sm:$0xff]
  %v54 = vld [vmem:[%s4 + $0x28] sm:$0xff]
  %v55 = vld [vmem:[%s4 + $0x30] sm:$0xff]
  %v56 = vld [vmem:[%s4 + $0x38] sm:$0xff]
  %v57 = vld [vmem:[%s4 + $0x40] sm:$0xff]
  %v58 = vld [vmem:[%s4 + $0x48] sm:$0xff]
  %v59 = vld [vmem:[%s4 + $0x50] sm:$0xff]
  %v60 = vld [vmem:[%s4 + $0x58] sm:$0xff]
  %v61 = vld [vmem:[%s4 + $0x60] sm:$0xff]
  %v62 = vld [vmem:[%s4 + $0x68] sm:$0xff]
  %v63 = vld [vmem:[%s4 + $0x70] sm:$0xff]
  %v64 = vld [vmem:[%s4 + $0x78] sm:$0xff]
  %v65 = vld [vmem:[%s4 + $0x80] sm:$0xff]
  %v66 = vld [vmem:[%s4 + $0x88] sm:$0xff]
  %v67 = vld [vmem:[%s4 + $0x90] sm:$0xff]
  %v68 = vld [vmem:[%s4 + $0x98] sm:$0xff]
  %v69 = vld [vmem:[%s4 + $0xa0] sm:$0xff]
  %v70 = vld [vmem:[%s4 + $0xa8] sm:$0xff]
  %v71 = vld [vmem:[%s4 + $0xb0] sm:$0xff]
  %v72 = vld [vmem:[%s4 + $0xb8] sm:$0xff]
  %v73 = vld [vmem:[%s5] sm:$0xff]
  %v74 = vld [vmem:[%s5 + $0x8] sm:$0xff]
  %v75 = vld [vmem:[%s5 + $0x10] sm:$0xff]
  %v76 = vld [vmem:[%s5 + $0x18] sm:$0xff]
  %v77 = vld [vmem:[%s5 + $0x20] sm:$0xff]
  %v78 = vld [vmem:[%s5 + $0x28] sm:$0xff]
  %v79 = vld [vmem:[%s5 + $0x30] sm:$0xff]
  %v80 = vld [vmem:[%s5 + $0x38] sm:$0xff]
  %v81 = vld [vmem:[%s6] sm:$0x1]
  %v82 = vld [vmem:[%s7] sm:$0x1]
  %v83 = vld [vmem:[%s8] sm:$0x1]
  %v84 = vld [vmem:[%s9] sm:$0xff]
  %v85 = vld [vmem:[%s9 + $0x8] sm:$0xff]
  %v86 = vld [vmem:[%s9 + $0x10] sm:$0xff]
  %v87 = vld [vmem:[%s9 + $0x18] sm:$0xff]
  %v88 = vld [vmem:[%s9 + $0x20] sm:$0xff]
  %v89 = vld [vmem:[%s9 + $0x28] sm:$0xff]
  %v90 = vld [vmem:[%s9 + $0x30] sm:$0xff]
  %v91 = vld [vmem:[%s9 + $0x38] sm:$0xff]
  %v92 = vld [vmem:[%s9 + $0x40] sm:$0xff]
  %v93 = vld [vmem:[%s9 + $0x48] sm:$0xff]
  %v94 = vld [vmem:[%s9 + $0x50] sm:$0xff]
  %v95 = vld [vmem:[%s9 + $0x58] sm:$0xff]
  %v96 = vld [vmem:[%s9 + $0x60] sm:$0xff]
  %v97 = vld [vmem:[%s9 + $0x68] sm:$0xff]
  %v98 = vld [vmem:[%s9 + $0x70] sm:$0xff]
  %v99 = vld [vmem:[%s9 + $0x78] sm:$0xff]
  %v100 = vld [vmem:[%s9 + $0x80] sm:$0xff]
  %v101 = vld [vmem:[%s9 + $0x88] sm:$0xff]
  %v102 = vld [vmem:[%s9 + $0x90] sm:$0xff]
  %v103 = vld [vmem:[%s9 + $0x98] sm:$0xff]
  %v104 = vld [vmem:[%s9 + $0xa0] sm:$0xff]
  %v105 = vld [vmem:[%s9 + $0xa8] sm:$0xff]
  %v106 = vld [vmem:[%s9 + $0xb0] sm:$0xff]
  %v107 = vld [vmem:[%s9 + $0xb8] sm:$0xff]
  %v108 = vld [vmem:[%s9 + $0xc0] sm:$0xff]
  %v109 = vld [vmem:[%s9 + $0xc8] sm:$0xff]
  %v110 = vld [vmem:[%s9 + $0xd0] sm:$0xff]
  %v111 = vld [vmem:[%s9 + $0xd8] sm:$0xff]
  %v112 = vld [vmem:[%s9 + $0xe0] sm:$0xff]
  %v113 = vld [vmem:[%s9 + $0xe8] sm:$0xff]
  %v114 = vld [vmem:[%s9 + $0xf0] sm:$0xff]
  %v115 = vld [vmem:[%s9 + $0xf8] sm:$0xff]
  %v116 = vld [vmem:[%s10] sm:$0xff]
  %v117 = vld [vmem:[%s10 + $0x8] sm:$0xff]
  %v118 = vld [vmem:[%s10 + $0x10] sm:$0xff]
  %v119 = vld [vmem:[%s10 + $0x18] sm:$0xff]
  %v120 = vld [vmem:[%s10 + $0x20] sm:$0xff]
  %v121 = vld [vmem:[%s10 + $0x28] sm:$0xff]
  %v122 = vld [vmem:[%s10 + $0x30] sm:$0xff]
  %v123 = vld [vmem:[%s10 + $0x38] sm:$0xff]
  %v124 = vld [vmem:[%s10 + $0x40] sm:$0xff]
  %v125 = vld [vmem:[%s10 + $0x48] sm:$0xff]
  %v126 = vld [vmem:[%s10 + $0x50] sm:$0xff]
  %v127 = vld [vmem:[%s10 + $0x58] sm:$0xff]
  %v128 = vld [vmem:[%s10 + $0x60] sm:$0xff]
  %v129 = vld [vmem:[%s10 + $0x68] sm:$0xff]
  %v130 = vld [vmem:[%s10 + $0x70] sm:$0xff]
  %v131 = vld [vmem:[%s10 + $0x78] sm:$0xff]
  %v132 = vld [vmem:[%s10 + $0x80] sm:$0xff]
  %v133 = vld [vmem:[%s10 + $0x88] sm:$0xff]
  %v134 = vld [vmem:[%s10 + $0x90] sm:$0xff]
  %v135 = vld [vmem:[%s10 + $0x98] sm:$0xff]
  %v136 = vld [vmem:[%s10 + $0xa0] sm:$0xff]
  %v137 = vld [vmem:[%s10 + $0xa8] sm:$0xff]
  %v138 = vld [vmem:[%s10 + $0xb0] sm:$0xff]
  %v139 = vld [vmem:[%s10 + $0xb8] sm:$0xff]
  %v140 = vld [vmem:[%s10 + $0xc0] sm:$0xff]
  %v141 = vld [vmem:[%s10 + $0xc8] sm:$0xff]
  %v142 = vld [vmem:[%s10 + $0xd0] sm:$0xff]
  %v143 = vld [vmem:[%s10 + $0xd8] sm:$0xff]
  %v144 = vld [vmem:[%s10 + $0xe0] sm:$0xff]
  %v145 = vld [vmem:[%s10 + $0xe8] sm:$0xff]
  %v146 = vld [vmem:[%s10 + $0xf0] sm:$0xff]
  %v147 = vld [vmem:[%s10 + $0xf8] sm:$0xff]
  %v148 = vmul.f32 %v41, %v41
  %v149 = vmul.f32 %v42, %v42
  %vm150 = vcmask 523264
  %v151 = vsel %vm150, %v148, 0.0
  %152 = vadd.xlane.f32.xlu0 %v151
  %v153 = vpop.xlane.xlu0 %152
  %v154 = vsel %vm150, %v149, 0.0
  %155 = vadd.xlane.f32.xlu0 %v154
  %v156 = vpop.xlane.xlu0 %155
  %v157 = vrcp.pop 64.0
  %v158 = vmul.f32 %v153, %v157
  %v159 = vmul.f32 %v156, %v157
  %v160 = vadd.f32 %v158, 1e-06
  %v161 = vadd.f32 %v159, 1e-06
  %v162 = vrsqrt.pop %v160
  %v163 = vrsqrt.pop %v161
  %v164 = vmul.f32 %v41, %v162
  %v165 = vmul.f32 %v42, %v163
  %v167 = vlaneseq
  %v168 = vshrl.u32 %v167, 7
  %v169 = vsub.s32 0, %v168
  %v170 = vrot.slane %v81, %v169
  %v172 = vmul.f32 %v164, %v170
  %v173 = vmul.f32 %v165, %v170
  %v175 = vsel %vm150, %v172, 0
  %v178 = vsel %vm150, %v173, 0
  %180 = vmatprep.subr.mxu0 %v50
  %181 = vmatpush1.msra.mxu0 %v49
  %182 = vmatprep.subr.mxu0 %v53
  %183 = vmatpush1.msra.mxu0 %v52
  %184 = vmatprep.subr.mxu0 %v56
  %185 = vmatpush1.msra.mxu0 %v55
  %186 = vmatprep.subr.mxu0 %v59
  %187 = vmatpush1.msra.mxu0 %v58
  %188 = vmatprep.subr.mxu0 %v62
  %189 = vmatpush1.msra.mxu0 %v61
  %190 = vmatprep.subr.mxu0 %v65
  %191 = vmatpush1.msra.mxu0 %v64
  %192 = vmatprep.subr.mxu0 %v68
  %193 = vmatpush1.msra.mxu0 %v67
  %194 = vmatprep.subr.mxu0 %v71
  %195 = vmatpush1.msra.mxu0 %v70
  %196 = vmatprep.subr.mxu0 0.0
  %197 = vmatpush1.msra.mxu0 0.0
  %198 = vmatprep.subr.mxu0 0.0
  %199 = vmatpush1.msra.mxu0 0.0
  %200 = vmatprep.subr.mxu0 0.0
  %201 = vmatpush1.msra.mxu0 0.0
  %202 = vmatprep.subr.mxu0 0.0
  %203 = vmatpush1.msra.mxu0 0.0
  %204 = vmatprep.subr.mxu0 0.0
  %205 = vmatpush1.msra.mxu0 0.0
  %206 = vmatprep.subr.mxu0 0.0
  %207 = vmatpush1.msra.mxu0 0.0
  %208 = vmatprep.subr.mxu0 0.0
  %209 = vmatpush1.msra.mxu0 0.0
  %210 = vmatprep.subr.mxu0 0.0
  %211 = vmatpush1.msra.mxu0 0.0
  %212 = vmatprep.subr.mxu0 0.0
  %213 = vmatpush1.msra.mxu0 0.0
  %214 = vmatprep.subr.mxu0 0.0
  %215 = vmatpush1.msra.mxu0 0.0
  %216 = vmatprep.subr.mxu0 0.0
  %217 = vmatpush1.msra.mxu0 0.0
  %218 = vmatprep.subr.mxu0 0.0
  %219 = vmatpush1.msra.mxu0 0.0
  %220 = vmatprep.subr.mxu0 0.0
  %221 = vmatpush1.msra.mxu0 0.0
  %222 = vmatprep.subr.mxu0 0.0
  %223 = vmatpush1.msra.mxu0 0.0
  %224 = vmatprep.subr.mxu0 0.0
  %225 = vmatpush1.msra.mxu0 0.0
  %226 = vmatprep.subr.mxu0 0.0
  %227 = vmatpush1.msra.mxu0 0.0
  %228 = vmatprep.subr.mxu0 0.0
  %229 = vmatpush1.msra.mxu0 0.0
  %230 = vmatprep.subr.mxu0 0.0
  %231 = vmatpush1.msra.mxu0 0.0
  %232 = vmatprep.subr.mxu0 0.0
  %233 = vmatpush1.msra.mxu0 0.0
  %234 = vmatprep.subr.mxu0 0.0
  %235 = vmatpush1.msra.mxu0 0.0
  %236 = vmatprep.subr.mxu0 0.0
  %237 = vmatpush1.msra.mxu0 0.0
  %238 = vmatprep.subr.mxu0 0.0
  %239 = vmatpush1.msra.mxu0 0.0
  %240 = vmatprep.subr.mxu0 0.0
  %241 = vmatpush1.msra.mxu0 0.0
  %242 = vmatprep.subr.mxu0 0.0
  %243 = vmatpush1.msra.mxu0 0.0
  %244 = vmatprep.mubr.f32.mxu0 0.0
  %245 = vmatmul.mubr.f32.gmra.mrb[0].mxu0 %v175
  %v246 = vpop.f32.mrb[0].mxu0
  %v247 = vadd.f32 0.0, %v246
  %v248 = vpop.f32.mrb[0].mxu0
  %v249 = vadd.f32 0.0, %v248
  %250 = vmatprep.mubr.f32.mxu0 0.0
  %251 = vmatmul.mubr.f32.gmra.mrb[0].mxu0 %v178
  %v252 = vpop.f32.mrb[0].mxu0
  %v253 = vadd.f32 0.0, %v252
  %v254 = vpop.f32.mrb[0].mxu0
  %v255 = vadd.f32 0.0, %v254
  %256 = vdwg.mxu0
  %257 = vmatprep.subr.mxu0 0.0
  %258 = vmatpush1.msra.mxu0 %v51
  %259 = vmatprep.subr.mxu0 0.0
  %260 = vmatpush1.msra.mxu0 %v54
  %261 = vmatprep.subr.mxu0 0.0
  %262 = vmatpush1.msra.mxu0 %v57
  %263 = vmatprep.subr.mxu0 0.0
  %264 = vmatpush1.msra.mxu0 %v60
  %265 = vmatprep.subr.mxu0 0.0
  %266 = vmatpush1.msra.mxu0 %v63
  %267 = vmatprep.subr.mxu0 0.0
  %268 = vmatpush1.msra.mxu0 %v66
  %269 = vmatprep.subr.mxu0 0.0
  %270 = vmatpush1.msra.mxu0 %v69
  %271 = vmatprep.subr.mxu0 0.0
  %272 = vmatpush1.msra.mxu0 %v72
  %273 = vmatprep.subr.mxu0 0.0
  %274 = vmatpush1.msra.mxu0 0.0
  %275 = vmatprep.subr.mxu0 0.0
  %276 = vmatpush1.msra.mxu0 0.0
  %277 = vmatprep.subr.mxu0 0.0
  %278 = vmatpush1.msra.mxu0 0.0
  %279 = vmatprep.subr.mxu0 0.0
  %280 = vmatpush1.msra.mxu0 0.0
  %281 = vmatprep.subr.mxu0 0.0
  %282 = vmatpush1.msra.mxu0 0.0
  %283 = vmatprep.subr.mxu0 0.0
  %284 = vmatpush1.msra.mxu0 0.0
  %285 = vmatprep.subr.mxu0 0.0
  %286 = vmatpush1.msra.mxu0 0.0
  %287 = vmatprep.subr.mxu0 0.0
  %288 = vmatpush1.msra.mxu0 0.0
  %289 = vmatprep.subr.mxu0 0.0
  %290 = vmatpush1.msra.mxu0 0.0
  %291 = vmatprep.subr.mxu0 0.0
  %292 = vmatpush1.msra.mxu0 0.0
  %293 = vmatprep.subr.mxu0 0.0
  %294 = vmatpush1.msra.mxu0 0.0
  %295 = vmatprep.subr.mxu0 0.0
  %296 = vmatpush1.msra.mxu0 0.0
  %297 = vmatprep.subr.mxu0 0.0
  %298 = vmatpush1.msra.mxu0 0.0
  %299 = vmatprep.subr.mxu0 0.0
  %300 = vmatpush1.msra.mxu0 0.0
  %301 = vmatprep.subr.mxu0 0.0
  %302 = vmatpush1.msra.mxu0 0.0
  %303 = vmatprep.subr.mxu0 0.0
  %304 = vmatpush1.msra.mxu0 0.0
  %305 = vmatprep.subr.mxu0 0.0
  %306 = vmatpush1.msra.mxu0 0.0
  %307 = vmatprep.subr.mxu0 0.0
  %308 = vmatpush1.msra.mxu0 0.0
  %309 = vmatprep.subr.mxu0 0.0
  %310 = vmatpush1.msra.mxu0 0.0
  %311 = vmatprep.subr.mxu0 0.0
  %312 = vmatpush1.msra.mxu0 0.0
  %313 = vmatprep.subr.mxu0 0.0
  %314 = vmatpush1.msra.mxu0 0.0
  %315 = vmatprep.subr.mxu0 0.0
  %316 = vmatpush1.msra.mxu0 0.0
  %317 = vmatprep.subr.mxu0 0.0
  %318 = vmatpush1.msra.mxu0 0.0
  %319 = vmatprep.subr.mxu0 0.0
  %320 = vmatpush1.msra.mxu0 0.0
  %321 = vmatprep.mubr.f32.mxu0 0.0
  %322 = vmatmul.mubr.f32.gmra.mrb[0].mxu0 %v175
  %v323 = vpop.f32.mrb[0].mxu0
  %v324 = vadd.f32 0.0, %v323
  %v325 = vpop.f32.mrb[0].mxu0
  %326 = vmatprep.mubr.f32.mxu0 0.0
  %327 = vmatmul.mubr.f32.gmra.mrb[0].mxu0 %v178
  %v328 = vpop.f32.mrb[0].mxu0
  %v329 = vadd.f32 0.0, %v328
  %v330 = vpop.f32.mrb[0].mxu0
  %331 = vdwg.mxu0
  %v332 = vmul.f32 %v247, %v45
  %v333 = vmul.f32 %v253, %v46
  %v334 = vmul.f32 %v249, %v47
  %v335 = vmul.f32 %v255, %v48
  %v336 = vadd.f32 %v332, %v334
  %v337 = vadd.f32 %v333, %v335
  %340 = vrot.lane.b32.xlu0 %v336, 64
  %v341 = vpop.permute.xlu0 %340
  %342 = vrot.lane.b32.xlu0 %v337, 64
  %v343 = vpop.permute.xlu0 %342
  %vm344 = vcmask 130048
  %v345 = vsel %vm344, %v336, 0
  %v347 = vsel %vm344, %v337, 0
  %v349 = vsel %vm344, %v341, 0
  %v351 = vsel %vm344, %v343, 0
  %353 = vmatprep.subr.mxu0 0.0
  %354 = vmatpush1.xpose.msra.mxu0 %v349
  %355 = vmatprep.subr.mxu0 0.0
  %356 = vmatpush1.xpose.msra.mxu0 %v351
  %357 = vmatprep.subr.mxu0 0.0
  %358 = vmatpush1.xpose.msra.mxu0 0.0
  %359 = vmatprep.subr.mxu0 0.0
  %360 = vmatpush1.xpose.msra.mxu0 0.0
  %361 = vmatprep.subr.mxu0 0.0
  %362 = vmatpush1.xpose.msra.mxu0 0.0
  %363 = vmatprep.subr.mxu0 0.0
  %364 = vmatpush1.xpose.msra.mxu0 0.0
  %365 = vmatprep.subr.mxu0 0.0
  %366 = vmatpush1.xpose.msra.mxu0 0.0
  %367 = vmatprep.subr.mxu0 0.0
  %368 = vmatpush1.xpose.msra.mxu0 0.0
  %369 = vmatprep.subr.mxu0 0.0
  %370 = vmatpush1.xpose.msra.mxu0 0.0
  %371 = vmatprep.subr.mxu0 0.0
  %372 = vmatpush1.xpose.msra.mxu0 0.0
  %373 = vmatprep.subr.mxu0 0.0
  %374 = vmatpush1.xpose.msra.mxu0 0.0
  %375 = vmatprep.subr.mxu0 0.0
  %376 = vmatpush1.xpose.msra.mxu0 0.0
  %377 = vmatprep.subr.mxu0 0.0
  %378 = vmatpush1.xpose.msra.mxu0 0.0
  %379 = vmatprep.subr.mxu0 0.0
  %380 = vmatpush1.xpose.msra.mxu0 0.0
  %381 = vmatprep.subr.mxu0 0.0
  %382 = vmatpush1.xpose.msra.mxu0 0.0
  %383 = vmatprep.subr.mxu0 0.0
  %384 = vmatpush1.xpose.msra.mxu0 0.0
  %385 = vmatprep.subr.mxu0 0.0
  %386 = vmatpush1.xpose.msra.mxu0 0.0
  %387 = vmatprep.subr.mxu0 0.0
  %388 = vmatpush1.xpose.msra.mxu0 0.0
  %389 = vmatprep.subr.mxu0 0.0
  %390 = vmatpush1.xpose.msra.mxu0 0.0
  %391 = vmatprep.subr.mxu0 0.0
  %392 = vmatpush1.xpose.msra.mxu0 0.0
  %393 = vmatprep.subr.mxu0 0.0
  %394 = vmatpush1.xpose.msra.mxu0 0.0
  %395 = vmatprep.subr.mxu0 0.0
  %396 = vmatpush1.xpose.msra.mxu0 0.0
  %397 = vmatprep.subr.mxu0 0.0
  %398 = vmatpush1.xpose.msra.mxu0 0.0
  %399 = vmatprep.subr.mxu0 0.0
  %400 = vmatpush1.xpose.msra.mxu0 0.0
  %401 = vmatprep.subr.mxu0 0.0
  %402 = vmatpush1.xpose.msra.mxu0 0.0
  %403 = vmatprep.subr.mxu0 0.0
  %404 = vmatpush1.xpose.msra.mxu0 0.0
  %405 = vmatprep.subr.mxu0 0.0
  %406 = vmatpush1.xpose.msra.mxu0 0.0
  %407 = vmatprep.subr.mxu0 0.0
  %408 = vmatpush1.xpose.msra.mxu0 0.0
  %409 = vmatprep.subr.mxu0 0.0
  %410 = vmatpush1.xpose.msra.mxu0 0.0
  %411 = vmatprep.subr.mxu0 0.0
  %412 = vmatpush1.xpose.msra.mxu0 0.0
  %413 = vmatprep.subr.mxu0 0.0
  %414 = vmatpush1.xpose.msra.mxu0 0.0
  %415 = vmatprep.subr.mxu0 0.0
  %416 = vmatpush1.xpose.msra.mxu0 0.0
  %417 = vmatprep.mubr.f32.mxu0 0.0
  %418 = vmatmul.mubr.f32.gmra.mrb[0].mxu0 %v345
  %v419 = vpop.f32.mrb[0].mxu0
  %v420 = vadd.f32 0.0, %v419
  %v421 = vpop.f32.mrb[0].mxu0
  %422 = vmatprep.mubr.f32.mxu0 0.0
  %423 = vmatmul.mubr.f32.gmra.mrb[0].mxu0 %v347
  %v424 = vpop.f32.mrb[0].mxu0
  %v425 = vadd.f32 0.0, %v424
  %v426 = vpop.f32.mrb[0].mxu0
  %427 = vdwg.mxu0
  %v428 = vmul.f32 %v420, 0.25
  %v429 = vmul.f32 %v425, 0.25
  %v430 = vadd.f32 %v428, %v43
  %v431 = vadd.f32 %v429, %v44
  %v432 = vsel %vm344, %v430, -inf
  %433 = vmax.xlane.f32.xlu0 %v432
  %v434 = vpop.xlane.xlu0 %433
  %v435 = vsel %vm344, %v431, -inf
  %436 = vmax.xlane.f32.xlu0 %v435
  %v437 = vpop.xlane.xlu0 %436
  %v438 = vsub.f32 %v430, %v434
  %v439 = vsub.f32 %v431, %v437
  %v440 = vmul.f32 %v438, 1.442695
  %v441 = vpow.pop %v440
  %v442 = vmul.f32 %v439, 1.442695
  %v443 = vpow.pop %v442
  %v444 = vsel %vm344, %v441, 0.0
  %445 = vadd.xlane.f32.xlu0 %v444
  %v446 = vpop.xlane.xlu0 %445
  %v447 = vsel %vm344, %v443, 0.0
  %448 = vadd.xlane.f32.xlu0 %v447
  %v449 = vpop.xlane.xlu0 %448
  %v450 = vrcp.pop %v446
  %v451 = vrcp.pop %v449
  %v452 = vmul.f32 %v441, %v450
  %v453 = vmul.f32 %v443, %v451
  %v455 = vsel %vm344, %v452, 0
  %v458 = vsel %vm344, %v453, 0
  %460 = vmatprep.subr.mxu0 0.0
  %461 = vmatpush1.msra.mxu0 %v324
  %462 = vmatprep.subr.mxu0 0.0
  %463 = vmatpush1.msra.mxu0 %v329
  %464 = vmatprep.subr.mxu0 0.0
  %465 = vmatpush1.msra.mxu0 0.0
  %466 = vmatprep.subr.mxu0 0.0
  %467 = vmatpush1.msra.mxu0 0.0
  %468 = vmatprep.subr.mxu0 0.0
  %469 = vmatpush1.msra.mxu0 0.0
  %470 = vmatprep.subr.mxu0 0.0
  %471 = vmatpush1.msra.mxu0 0.0
  %472 = vmatprep.subr.mxu0 0.0
  %473 = vmatpush1.msra.mxu0 0.0
  %474 = vmatprep.subr.mxu0 0.0
  %475 = vmatpush1.msra.mxu0 0.0
  %476 = vmatprep.subr.mxu0 0.0
  %477 = vmatpush1.msra.mxu0 0.0
  %478 = vmatprep.subr.mxu0 0.0
  %479 = vmatpush1.msra.mxu0 0.0
  %480 = vmatprep.subr.mxu0 0.0
  %481 = vmatpush1.msra.mxu0 0.0
  %482 = vmatprep.subr.mxu0 0.0
  %483 = vmatpush1.msra.mxu0 0.0
  %484 = vmatprep.subr.mxu0 0.0
  %485 = vmatpush1.msra.mxu0 0.0
  %486 = vmatprep.subr.mxu0 0.0
  %487 = vmatpush1.msra.mxu0 0.0
  %488 = vmatprep.subr.mxu0 0.0
  %489 = vmatpush1.msra.mxu0 0.0
  %490 = vmatprep.subr.mxu0 0.0
  %491 = vmatpush1.msra.mxu0 0.0
  %492 = vmatprep.subr.mxu0 0.0
  %493 = vmatpush1.msra.mxu0 0.0
  %494 = vmatprep.subr.mxu0 0.0
  %495 = vmatpush1.msra.mxu0 0.0
  %496 = vmatprep.subr.mxu0 0.0
  %497 = vmatpush1.msra.mxu0 0.0
  %498 = vmatprep.subr.mxu0 0.0
  %499 = vmatpush1.msra.mxu0 0.0
  %500 = vmatprep.subr.mxu0 0.0
  %501 = vmatpush1.msra.mxu0 0.0
  %502 = vmatprep.subr.mxu0 0.0
  %503 = vmatpush1.msra.mxu0 0.0
  %504 = vmatprep.subr.mxu0 0.0
  %505 = vmatpush1.msra.mxu0 0.0
  %506 = vmatprep.subr.mxu0 0.0
  %507 = vmatpush1.msra.mxu0 0.0
  %508 = vmatprep.subr.mxu0 0.0
  %509 = vmatpush1.msra.mxu0 0.0
  %510 = vmatprep.subr.mxu0 0.0
  %511 = vmatpush1.msra.mxu0 0.0
  %512 = vmatprep.subr.mxu0 0.0
  %513 = vmatpush1.msra.mxu0 0.0
  %514 = vmatprep.subr.mxu0 0.0
  %515 = vmatpush1.msra.mxu0 0.0
  %516 = vmatprep.subr.mxu0 0.0
  %517 = vmatpush1.msra.mxu0 0.0
  %518 = vmatprep.subr.mxu0 0.0
  %519 = vmatpush1.msra.mxu0 0.0
  %520 = vmatprep.subr.mxu0 0.0
  %521 = vmatpush1.msra.mxu0 0.0
  %522 = vmatprep.subr.mxu0 0.0
  %523 = vmatpush1.msra.mxu0 0.0
  %524 = vmatprep.mubr.f32.mxu0 0.0
  %525 = vmatmul.mubr.f32.gmra.mrb[0].mxu0 %v455
  %v526 = vpop.f32.mrb[0].mxu0
  %v527 = vadd.f32 0.0, %v526
  %v528 = vpop.f32.mrb[0].mxu0
  %529 = vmatprep.mubr.f32.mxu0 0.0
  %530 = vmatmul.mubr.f32.gmra.mrb[0].mxu0 %v458
  %v531 = vpop.f32.mrb[0].mxu0
  %v532 = vadd.f32 0.0, %v531
  %v533 = vpop.f32.mrb[0].mxu0
  %534 = vdwg.mxu0
  %535 = vrot.lane.b32.xlu0 %v336, 112
  %v536 = vpop.permute.xlu0 %535
  %537 = vrot.lane.b32.xlu0 %v337, 112
  %v538 = vpop.permute.xlu0 %537
  %539 = vrot.lane.b32.xlu0 %v336, 48
  %v540 = vpop.permute.xlu0 %539
  %541 = vrot.lane.b32.xlu0 %v337, 48
  %v542 = vpop.permute.xlu0 %541
  %v543 = vsel %vm344, %v536, 0
  %v545 = vsel %vm344, %v538, 0
  %v547 = vsel %vm344, %v540, 0
  %v549 = vsel %vm344, %v542, 0
  %551 = vmatprep.subr.mxu0 0.0
  %552 = vmatpush1.xpose.msra.mxu0 %v547
  %553 = vmatprep.subr.mxu0 0.0
  %554 = vmatpush1.xpose.msra.mxu0 %v549
  %555 = vmatprep.subr.mxu0 0.0
  %556 = vmatpush1.xpose.msra.mxu0 0.0
  %557 = vmatprep.subr.mxu0 0.0
  %558 = vmatpush1.xpose.msra.mxu0 0.0
  %559 = vmatprep.subr.mxu0 0.0
  %560 = vmatpush1.xpose.msra.mxu0 0.0
  %561 = vmatprep.subr.mxu0 0.0
  %562 = vmatpush1.xpose.msra.mxu0 0.0
  %563 = vmatprep.subr.mxu0 0.0
  %564 = vmatpush1.xpose.msra.mxu0 0.0
  %565 = vmatprep.subr.mxu0 0.0
  %566 = vmatpush1.xpose.msra.mxu0 0.0
  %567 = vmatprep.subr.mxu0 0.0
  %568 = vmatpush1.xpose.msra.mxu0 0.0
  %569 = vmatprep.subr.mxu0 0.0
  %570 = vmatpush1.xpose.msra.mxu0 0.0
  %571 = vmatprep.subr.mxu0 0.0
  %572 = vmatpush1.xpose.msra.mxu0 0.0
  %573 = vmatprep.subr.mxu0 0.0
  %574 = vmatpush1.xpose.msra.mxu0 0.0
  %575 = vmatprep.subr.mxu0 0.0
  %576 = vmatpush1.xpose.msra.mxu0 0.0
  %577 = vmatprep.subr.mxu0 0.0
  %578 = vmatpush1.xpose.msra.mxu0 0.0
  %579 = vmatprep.subr.mxu0 0.0
  %580 = vmatpush1.xpose.msra.mxu0 0.0
  %581 = vmatprep.subr.mxu0 0.0
  %582 = vmatpush1.xpose.msra.mxu0 0.0
  %583 = vmatprep.subr.mxu0 0.0
  %584 = vmatpush1.xpose.msra.mxu0 0.0
  %585 = vmatprep.subr.mxu0 0.0
  %586 = vmatpush1.xpose.msra.mxu0 0.0
  %587 = vmatprep.subr.mxu0 0.0
  %588 = vmatpush1.xpose.msra.mxu0 0.0
  %589 = vmatprep.subr.mxu0 0.0
  %590 = vmatpush1.xpose.msra.mxu0 0.0
  %591 = vmatprep.subr.mxu0 0.0
  %592 = vmatpush1.xpose.msra.mxu0 0.0
  %593 = vmatprep.subr.mxu0 0.0
  %594 = vmatpush1.xpose.msra.mxu0 0.0
  %595 = vmatprep.subr.mxu0 0.0
  %596 = vmatpush1.xpose.msra.mxu0 0.0
  %597 = vmatprep.subr.mxu0 0.0
  %598 = vmatpush1.xpose.msra.mxu0 0.0
  %599 = vmatprep.subr.mxu0 0.0
  %600 = vmatpush1.xpose.msra.mxu0 0.0
  %601 = vmatprep.subr.mxu0 0.0
  %602 = vmatpush1.xpose.msra.mxu0 0.0
  %603 = vmatprep.subr.mxu0 0.0
  %604 = vmatpush1.xpose.msra.mxu0 0.0
  %605 = vmatprep.subr.mxu0 0.0
  %606 = vmatpush1.xpose.msra.mxu0 0.0
  %607 = vmatprep.subr.mxu0 0.0
  %608 = vmatpush1.xpose.msra.mxu0 0.0
  %609 = vmatprep.subr.mxu0 0.0
  %610 = vmatpush1.xpose.msra.mxu0 0.0
  %611 = vmatprep.subr.mxu0 0.0
  %612 = vmatpush1.xpose.msra.mxu0 0.0
  %613 = vmatprep.subr.mxu0 0.0
  %614 = vmatpush1.xpose.msra.mxu0 0.0
  %615 = vmatprep.mubr.f32.mxu0 0.0
  %616 = vmatmul.mubr.f32.gmra.mrb[0].mxu0 %v543
  %v617 = vpop.f32.mrb[0].mxu0
  %v618 = vadd.f32 0.0, %v617
  %v619 = vpop.f32.mrb[0].mxu0
  %620 = vmatprep.mubr.f32.mxu0 0.0
  %621 = vmatmul.mubr.f32.gmra.mrb[0].mxu0 %v545
  %v622 = vpop.f32.mrb[0].mxu0
  %v623 = vadd.f32 0.0, %v622
  %v624 = vpop.f32.mrb[0].mxu0
  %625 = vdwg.mxu0
  %v626 = vmul.f32 %v618, 0.25
  %v627 = vmul.f32 %v623, 0.25
  %v628 = vadd.f32 %v626, %v43
  %v629 = vadd.f32 %v627, %v44
  %v630 = vsel %vm344, %v628, -inf
  %631 = vmax.xlane.f32.xlu0 %v630
  %v632 = vpop.xlane.xlu0 %631
  %v633 = vsel %vm344, %v629, -inf
  %634 = vmax.xlane.f32.xlu0 %v633
  %v635 = vpop.xlane.xlu0 %634
  %v636 = vsub.f32 %v628, %v632
  %v637 = vsub.f32 %v629, %v635
  %v638 = vmul.f32 %v636, 1.442695
  %v639 = vpow.pop %v638
  %v640 = vmul.f32 %v637, 1.442695
  %v641 = vpow.pop %v640
  %v642 = vsel %vm344, %v639, 0.0
  %643 = vadd.xlane.f32.xlu0 %v642
  %v644 = vpop.xlane.xlu0 %643
  %v645 = vsel %vm344, %v641, 0.0
  %646 = vadd.xlane.f32.xlu0 %v645
  %v647 = vpop.xlane.xlu0 %646
  %v648 = vrcp.pop %v644
  %v649 = vrcp.pop %v647
  %v650 = vmul.f32 %v639, %v648
  %v651 = vmul.f32 %v641, %v649
  %654 = vrot.lane.b32.xlu0 %v324, 112
  %v655 = vpop.permute.xlu0 %654
  %656 = vrot.lane.b32.xlu0 %v329, 112
  %v657 = vpop.permute.xlu0 %656
  %v661 = vsel %vm344, %v650, 0
  %v664 = vsel %vm344, %v651, 0
  %666 = vmatprep.subr.mxu0 0.0
  %667 = vmatpush1.msra.mxu0 %v655
  %668 = vmatprep.subr.mxu0 0.0
  %669 = vmatpush1.msra.mxu0 %v657
  %670 = vmatprep.subr.mxu0 0.0
  %671 = vmatpush1.msra.mxu0 0.0
  %672 = vmatprep.subr.mxu0 0.0
  %673 = vmatpush1.msra.mxu0 0.0
  %674 = vmatprep.subr.mxu0 0.0
  %675 = vmatpush1.msra.mxu0 0.0
  %676 = vmatprep.subr.mxu0 0.0
  %677 = vmatpush1.msra.mxu0 0.0
  %678 = vmatprep.subr.mxu0 0.0
  %679 = vmatpush1.msra.mxu0 0.0
  %680 = vmatprep.subr.mxu0 0.0
  %681 = vmatpush1.msra.mxu0 0.0
  %682 = vmatprep.subr.mxu0 0.0
  %683 = vmatpush1.msra.mxu0 0.0
  %684 = vmatprep.subr.mxu0 0.0
  %685 = vmatpush1.msra.mxu0 0.0
  %686 = vmatprep.subr.mxu0 0.0
  %687 = vmatpush1.msra.mxu0 0.0
  %688 = vmatprep.subr.mxu0 0.0
  %689 = vmatpush1.msra.mxu0 0.0
  %690 = vmatprep.subr.mxu0 0.0
  %691 = vmatpush1.msra.mxu0 0.0
  %692 = vmatprep.subr.mxu0 0.0
  %693 = vmatpush1.msra.mxu0 0.0
  %694 = vmatprep.subr.mxu0 0.0
  %695 = vmatpush1.msra.mxu0 0.0
  %696 = vmatprep.subr.mxu0 0.0
  %697 = vmatpush1.msra.mxu0 0.0
  %698 = vmatprep.subr.mxu0 0.0
  %699 = vmatpush1.msra.mxu0 0.0
  %700 = vmatprep.subr.mxu0 0.0
  %701 = vmatpush1.msra.mxu0 0.0
  %702 = vmatprep.subr.mxu0 0.0
  %703 = vmatpush1.msra.mxu0 0.0
  %704 = vmatprep.subr.mxu0 0.0
  %705 = vmatpush1.msra.mxu0 0.0
  %706 = vmatprep.subr.mxu0 0.0
  %707 = vmatpush1.msra.mxu0 0.0
  %708 = vmatprep.subr.mxu0 0.0
  %709 = vmatpush1.msra.mxu0 0.0
  %710 = vmatprep.subr.mxu0 0.0
  %711 = vmatpush1.msra.mxu0 0.0
  %712 = vmatprep.subr.mxu0 0.0
  %713 = vmatpush1.msra.mxu0 0.0
  %714 = vmatprep.subr.mxu0 0.0
  %715 = vmatpush1.msra.mxu0 0.0
  %716 = vmatprep.subr.mxu0 0.0
  %717 = vmatpush1.msra.mxu0 0.0
  %718 = vmatprep.subr.mxu0 0.0
  %719 = vmatpush1.msra.mxu0 0.0
  %720 = vmatprep.subr.mxu0 0.0
  %721 = vmatpush1.msra.mxu0 0.0
  %722 = vmatprep.subr.mxu0 0.0
  %723 = vmatpush1.msra.mxu0 0.0
  %724 = vmatprep.subr.mxu0 0.0
  %725 = vmatpush1.msra.mxu0 0.0
  %726 = vmatprep.subr.mxu0 0.0
  %727 = vmatpush1.msra.mxu0 0.0
  %728 = vmatprep.subr.mxu0 0.0
  %729 = vmatpush1.msra.mxu0 0.0
  %730 = vmatprep.mubr.f32.mxu0 0.0
  %731 = vmatmul.mubr.f32.gmra.mrb[0].mxu0 %v661
  %v732 = vpop.f32.mrb[0].mxu0
  %v733 = vadd.f32 0.0, %v732
  %v734 = vpop.f32.mrb[0].mxu0
  %735 = vmatprep.mubr.f32.mxu0 0.0
  %736 = vmatmul.mubr.f32.gmra.mrb[0].mxu0 %v664
  %v737 = vpop.f32.mrb[0].mxu0
  %v738 = vadd.f32 0.0, %v737
  %v739 = vpop.f32.mrb[0].mxu0
  %740 = vdwg.mxu0
  %v742 = vsel %vm344, %v733, 0
  %v745 = vsel %vm344, %v738, 0
  %747 = vmatprep.subr.mxu0 0.0
  %748 = vmatpush1.msra.mxu0 %v75
  %749 = vmatprep.subr.mxu0 0.0
  %750 = vmatpush1.msra.mxu0 %v76
  %751 = vmatprep.subr.mxu0 0.0
  %752 = vmatpush1.msra.mxu0 0.0
  %753 = vmatprep.subr.mxu0 0.0
  %754 = vmatpush1.msra.mxu0 0.0
  %755 = vmatprep.subr.mxu0 0.0
  %756 = vmatpush1.msra.mxu0 0.0
  %757 = vmatprep.subr.mxu0 0.0
  %758 = vmatpush1.msra.mxu0 0.0
  %759 = vmatprep.subr.mxu0 0.0
  %760 = vmatpush1.msra.mxu0 0.0
  %761 = vmatprep.subr.mxu0 0.0
  %762 = vmatpush1.msra.mxu0 0.0
  %763 = vmatprep.subr.mxu0 0.0
  %764 = vmatpush1.msra.mxu0 0.0
  %765 = vmatprep.subr.mxu0 0.0
  %766 = vmatpush1.msra.mxu0 0.0
  %767 = vmatprep.subr.mxu0 0.0
  %768 = vmatpush1.msra.mxu0 0.0
  %769 = vmatprep.subr.mxu0 0.0
  %770 = vmatpush1.msra.mxu0 0.0
  %771 = vmatprep.subr.mxu0 0.0
  %772 = vmatpush1.msra.mxu0 0.0
  %773 = vmatprep.subr.mxu0 0.0
  %774 = vmatpush1.msra.mxu0 0.0
  %775 = vmatprep.subr.mxu0 0.0
  %776 = vmatpush1.msra.mxu0 0.0
  %777 = vmatprep.subr.mxu0 0.0
  %778 = vmatpush1.msra.mxu0 0.0
  %779 = vmatprep.subr.mxu0 0.0
  %780 = vmatpush1.msra.mxu0 0.0
  %781 = vmatprep.subr.mxu0 0.0
  %782 = vmatpush1.msra.mxu0 0.0
  %783 = vmatprep.subr.mxu0 0.0
  %784 = vmatpush1.msra.mxu0 0.0
  %785 = vmatprep.subr.mxu0 0.0
  %786 = vmatpush1.msra.mxu0 0.0
  %787 = vmatprep.subr.mxu0 0.0
  %788 = vmatpush1.msra.mxu0 0.0
  %789 = vmatprep.subr.mxu0 0.0
  %790 = vmatpush1.msra.mxu0 0.0
  %791 = vmatprep.subr.mxu0 0.0
  %792 = vmatpush1.msra.mxu0 0.0
  %793 = vmatprep.subr.mxu0 0.0
  %794 = vmatpush1.msra.mxu0 0.0
  %795 = vmatprep.subr.mxu0 0.0
  %796 = vmatpush1.msra.mxu0 0.0
  %797 = vmatprep.subr.mxu0 0.0
  %798 = vmatpush1.msra.mxu0 0.0
  %799 = vmatprep.subr.mxu0 0.0
  %800 = vmatpush1.msra.mxu0 0.0
  %801 = vmatprep.subr.mxu0 0.0
  %802 = vmatpush1.msra.mxu0 0.0
  %803 = vmatprep.subr.mxu0 0.0
  %804 = vmatpush1.msra.mxu0 0.0
  %805 = vmatprep.subr.mxu0 0.0
  %806 = vmatpush1.msra.mxu0 0.0
  %807 = vmatprep.subr.mxu0 0.0
  %808 = vmatpush1.msra.mxu0 0.0
  %809 = vmatprep.subr.mxu0 0.0
  %810 = vmatpush1.msra.mxu0 0.0
  %811 = vmatprep.mubr.f32.mxu0 0.0
  %812 = vmatmul.mubr.f32.gmra.mrb[0].mxu0 %v742
  %v813 = vpop.f32.mrb[0].mxu0
  %v814 = vadd.f32 0.0, %v813
  %v815 = vpop.f32.mrb[0].mxu0
  %816 = vmatprep.mubr.f32.mxu0 0.0
  %817 = vmatmul.mubr.f32.gmra.mrb[0].mxu0 %v745
  %v818 = vpop.f32.mrb[0].mxu0
  %v819 = vadd.f32 0.0, %v818
  %v820 = vpop.f32.mrb[0].mxu0
  %821 = vdwg.mxu0
  %v823 = vsel %vm344, %v527, 0
  %v826 = vsel %vm344, %v532, 0
  %828 = vmatprep.subr.mxu0 0.0
  %829 = vmatpush1.msra.mxu0 %v73
  %830 = vmatprep.subr.mxu0 0.0
  %831 = vmatpush1.msra.mxu0 %v74
  %832 = vmatprep.subr.mxu0 0.0
  %833 = vmatpush1.msra.mxu0 0.0
  %834 = vmatprep.subr.mxu0 0.0
  %835 = vmatpush1.msra.mxu0 0.0
  %836 = vmatprep.subr.mxu0 0.0
  %837 = vmatpush1.msra.mxu0 0.0
  %838 = vmatprep.subr.mxu0 0.0
  %839 = vmatpush1.msra.mxu0 0.0
  %840 = vmatprep.subr.mxu0 0.0
  %841 = vmatpush1.msra.mxu0 0.0
  %842 = vmatprep.subr.mxu0 0.0
  %843 = vmatpush1.msra.mxu0 0.0
  %844 = vmatprep.subr.mxu0 0.0
  %845 = vmatpush1.msra.mxu0 0.0
  %846 = vmatprep.subr.mxu0 0.0
  %847 = vmatpush1.msra.mxu0 0.0
  %848 = vmatprep.subr.mxu0 0.0
  %849 = vmatpush1.msra.mxu0 0.0
  %850 = vmatprep.subr.mxu0 0.0
  %851 = vmatpush1.msra.mxu0 0.0
  %852 = vmatprep.subr.mxu0 0.0
  %853 = vmatpush1.msra.mxu0 0.0
  %854 = vmatprep.subr.mxu0 0.0
  %855 = vmatpush1.msra.mxu0 0.0
  %856 = vmatprep.subr.mxu0 0.0
  %857 = vmatpush1.msra.mxu0 0.0
  %858 = vmatprep.subr.mxu0 0.0
  %859 = vmatpush1.msra.mxu0 0.0
  %860 = vmatprep.subr.mxu0 0.0
  %861 = vmatpush1.msra.mxu0 0.0
  %862 = vmatprep.subr.mxu0 0.0
  %863 = vmatpush1.msra.mxu0 0.0
  %864 = vmatprep.subr.mxu0 0.0
  %865 = vmatpush1.msra.mxu0 0.0
  %866 = vmatprep.subr.mxu0 0.0
  %867 = vmatpush1.msra.mxu0 0.0
  %868 = vmatprep.subr.mxu0 0.0
  %869 = vmatpush1.msra.mxu0 0.0
  %870 = vmatprep.subr.mxu0 0.0
  %871 = vmatpush1.msra.mxu0 0.0
  %872 = vmatprep.subr.mxu0 0.0
  %873 = vmatpush1.msra.mxu0 0.0
  %874 = vmatprep.subr.mxu0 0.0
  %875 = vmatpush1.msra.mxu0 0.0
  %876 = vmatprep.subr.mxu0 0.0
  %877 = vmatpush1.msra.mxu0 0.0
  %878 = vmatprep.subr.mxu0 0.0
  %879 = vmatpush1.msra.mxu0 0.0
  %880 = vmatprep.subr.mxu0 0.0
  %881 = vmatpush1.msra.mxu0 0.0
  %882 = vmatprep.subr.mxu0 0.0
  %883 = vmatpush1.msra.mxu0 0.0
  %884 = vmatprep.subr.mxu0 0.0
  %885 = vmatpush1.msra.mxu0 0.0
  %886 = vmatprep.subr.mxu0 0.0
  %887 = vmatpush1.msra.mxu0 0.0
  %888 = vmatprep.subr.mxu0 0.0
  %889 = vmatpush1.msra.mxu0 0.0
  %890 = vmatprep.subr.mxu0 0.0
  %891 = vmatpush1.msra.mxu0 0.0
  %892 = vmatprep.mubr.f32.mxu0 0.0
  %893 = vmatmul.mubr.f32.gmra.mrb[0].mxu0 %v823
  %v894 = vpop.f32.mrb[0].mxu0
  %v895 = vadd.f32 %v814, %v894
  %v896 = vpop.f32.mrb[0].mxu0
  %897 = vmatprep.mubr.f32.mxu0 0.0
  %898 = vmatmul.mubr.f32.gmra.mrb[0].mxu0 %v826
  %v899 = vpop.f32.mrb[0].mxu0
  %v900 = vadd.f32 %v819, %v899
  %v901 = vpop.f32.mrb[0].mxu0
  %902 = vdwg.mxu0
  %903 = vrot.lane.b32.xlu0 %v336, 96
  %v904 = vpop.permute.xlu0 %903
  %905 = vrot.lane.b32.xlu0 %v337, 96
  %v906 = vpop.permute.xlu0 %905
  %907 = vrot.lane.b32.xlu0 %v336, 32
  %v908 = vpop.permute.xlu0 %907
  %909 = vrot.lane.b32.xlu0 %v337, 32
  %v910 = vpop.permute.xlu0 %909
  %v911 = vsel %vm344, %v904, 0
  %v913 = vsel %vm344, %v906, 0
  %v915 = vsel %vm344, %v908, 0
  %v917 = vsel %vm344, %v910, 0
  %919 = vmatprep.subr.mxu0 0.0
  %920 = vmatpush1.xpose.msra.mxu0 %v915
  %921 = vmatprep.subr.mxu0 0.0
  %922 = vmatpush1.xpose.msra.mxu0 %v917
  %923 = vmatprep.subr.mxu0 0.0
  %924 = vmatpush1.xpose.msra.mxu0 0.0
  %925 = vmatprep.subr.mxu0 0.0
  %926 = vmatpush1.xpose.msra.mxu0 0.0
  %927 = vmatprep.subr.mxu0 0.0
  %928 = vmatpush1.xpose.msra.mxu0 0.0
  %929 = vmatprep.subr.mxu0 0.0
  %930 = vmatpush1.xpose.msra.mxu0 0.0
  %931 = vmatprep.subr.mxu0 0.0
  %932 = vmatpush1.xpose.msra.mxu0 0.0
  %933 = vmatprep.subr.mxu0 0.0
  %934 = vmatpush1.xpose.msra.mxu0 0.0
  %935 = vmatprep.subr.mxu0 0.0
  %936 = vmatpush1.xpose.msra.mxu0 0.0
  %937 = vmatprep.subr.mxu0 0.0
  %938 = vmatpush1.xpose.msra.mxu0 0.0
  %939 = vmatprep.subr.mxu0 0.0
  %940 = vmatpush1.xpose.msra.mxu0 0.0
  %941 = vmatprep.subr.mxu0 0.0
  %942 = vmatpush1.xpose.msra.mxu0 0.0
  %943 = vmatprep.subr.mxu0 0.0
  %944 = vmatpush1.xpose.msra.mxu0 0.0
  %945 = vmatprep.subr.mxu0 0.0
  %946 = vmatpush1.xpose.msra.mxu0 0.0
  %947 = vmatprep.subr.mxu0 0.0
  %948 = vmatpush1.xpose.msra.mxu0 0.0
  %949 = vmatprep.subr.mxu0 0.0
  %950 = vmatpush1.xpose.msra.mxu0 0.0
  %951 = vmatprep.subr.mxu0 0.0
  %952 = vmatpush1.xpose.msra.mxu0 0.0
  %953 = vmatprep.subr.mxu0 0.0
  %954 = vmatpush1.xpose.msra.mxu0 0.0
  %955 = vmatprep.subr.mxu0 0.0
  %956 = vmatpush1.xpose.msra.mxu0 0.0
  %957 = vmatprep.subr.mxu0 0.0
  %958 = vmatpush1.xpose.msra.mxu0 0.0
  %959 = vmatprep.subr.mxu0 0.0
  %960 = vmatpush1.xpose.msra.mxu0 0.0
  %961 = vmatprep.subr.mxu0 0.0
  %962 = vmatpush1.xpose.msra.mxu0 0.0
  %963 = vmatprep.subr.mxu0 0.0
  %964 = vmatpush1.xpose.msra.mxu0 0.0
  %965 = vmatprep.subr.mxu0 0.0
  %966 = vmatpush1.xpose.msra.mxu0 0.0
  %967 = vmatprep.subr.mxu0 0.0
  %968 = vmatpush1.xpose.msra.mxu0 0.0
  %969 = vmatprep.subr.mxu0 0.0
  %970 = vmatpush1.xpose.msra.mxu0 0.0
  %971 = vmatprep.subr.mxu0 0.0
  %972 = vmatpush1.xpose.msra.mxu0 0.0
  %973 = vmatprep.subr.mxu0 0.0
  %974 = vmatpush1.xpose.msra.mxu0 0.0
  %975 = vmatprep.subr.mxu0 0.0
  %976 = vmatpush1.xpose.msra.mxu0 0.0
  %977 = vmatprep.subr.mxu0 0.0
  %978 = vmatpush1.xpose.msra.mxu0 0.0
  %979 = vmatprep.subr.mxu0 0.0
  %980 = vmatpush1.xpose.msra.mxu0 0.0
  %981 = vmatprep.subr.mxu0 0.0
  %982 = vmatpush1.xpose.msra.mxu0 0.0
  %983 = vmatprep.mubr.f32.mxu0 0.0
  %984 = vmatmul.mubr.f32.gmra.mrb[0].mxu0 %v911
  %v985 = vpop.f32.mrb[0].mxu0
  %v986 = vadd.f32 0.0, %v985
  %v987 = vpop.f32.mrb[0].mxu0
  %988 = vmatprep.mubr.f32.mxu0 0.0
  %989 = vmatmul.mubr.f32.gmra.mrb[0].mxu0 %v913
  %v990 = vpop.f32.mrb[0].mxu0
  %v991 = vadd.f32 0.0, %v990
  %v992 = vpop.f32.mrb[0].mxu0
  %993 = vdwg.mxu0
  %v994 = vmul.f32 %v986, 0.25
  %v995 = vmul.f32 %v991, 0.25
  %v996 = vadd.f32 %v994, %v43
  %v997 = vadd.f32 %v995, %v44
  %v998 = vsel %vm344, %v996, -inf
  %999 = vmax.xlane.f32.xlu0 %v998
  %v1000 = vpop.xlane.xlu0 %999
  %v1001 = vsel %vm344, %v997, -inf
  %1002 = vmax.xlane.f32.xlu0 %v1001
  %v1003 = vpop.xlane.xlu0 %1002
  %v1004 = vsub.f32 %v996, %v1000
  %v1005 = vsub.f32 %v997, %v1003
  %v1006 = vmul.f32 %v1004, 1.442695
  %v1007 = vpow.pop %v1006
  %v1008 = vmul.f32 %v1005, 1.442695
  %v1009 = vpow.pop %v1008
  %v1010 = vsel %vm344, %v1007, 0.0
  %1011 = vadd.xlane.f32.xlu0 %v1010
  %v1012 = vpop.xlane.xlu0 %1011
  %v1013 = vsel %vm344, %v1009, 0.0
  %1014 = vadd.xlane.f32.xlu0 %v1013
  %v1015 = vpop.xlane.xlu0 %1014
  %v1016 = vrcp.pop %v1012
  %v1017 = vrcp.pop %v1015
  %v1018 = vmul.f32 %v1007, %v1016
  %v1019 = vmul.f32 %v1009, %v1017
  %1020 = vrot.lane.b32.xlu0 %v324, 96
  %v1021 = vpop.permute.xlu0 %1020
  %1022 = vrot.lane.b32.xlu0 %v329, 96
  %v1023 = vpop.permute.xlu0 %1022
  %v1027 = vsel %vm344, %v1018, 0
  %v1030 = vsel %vm344, %v1019, 0
  %1032 = vmatprep.subr.mxu0 0.0
  %1033 = vmatpush1.msra.mxu0 %v1021
  %1034 = vmatprep.subr.mxu0 0.0
  %1035 = vmatpush1.msra.mxu0 %v1023
  %1036 = vmatprep.subr.mxu0 0.0
  %1037 = vmatpush1.msra.mxu0 0.0
  %1038 = vmatprep.subr.mxu0 0.0
  %1039 = vmatpush1.msra.mxu0 0.0
  %1040 = vmatprep.subr.mxu0 0.0
  %1041 = vmatpush1.msra.mxu0 0.0
  %1042 = vmatprep.subr.mxu0 0.0
  %1043 = vmatpush1.msra.mxu0 0.0
  %1044 = vmatprep.subr.mxu0 0.0
  %1045 = vmatpush1.msra.mxu0 0.0
  %1046 = vmatprep.subr.mxu0 0.0
  %1047 = vmatpush1.msra.mxu0 0.0
  %1048 = vmatprep.subr.mxu0 0.0
  %1049 = vmatpush1.msra.mxu0 0.0
  %1050 = vmatprep.subr.mxu0 0.0
  %1051 = vmatpush1.msra.mxu0 0.0
  %1052 = vmatprep.subr.mxu0 0.0
  %1053 = vmatpush1.msra.mxu0 0.0
  %1054 = vmatprep.subr.mxu0 0.0
  %1055 = vmatpush1.msra.mxu0 0.0
  %1056 = vmatprep.subr.mxu0 0.0
  %1057 = vmatpush1.msra.mxu0 0.0
  %1058 = vmatprep.subr.mxu0 0.0
  %1059 = vmatpush1.msra.mxu0 0.0
  %1060 = vmatprep.subr.mxu0 0.0
  %1061 = vmatpush1.msra.mxu0 0.0
  %1062 = vmatprep.subr.mxu0 0.0
  %1063 = vmatpush1.msra.mxu0 0.0
  %1064 = vmatprep.subr.mxu0 0.0
  %1065 = vmatpush1.msra.mxu0 0.0
  %1066 = vmatprep.subr.mxu0 0.0
  %1067 = vmatpush1.msra.mxu0 0.0
  %1068 = vmatprep.subr.mxu0 0.0
  %1069 = vmatpush1.msra.mxu0 0.0
  %1070 = vmatprep.subr.mxu0 0.0
  %1071 = vmatpush1.msra.mxu0 0.0
  %1072 = vmatprep.subr.mxu0 0.0
  %1073 = vmatpush1.msra.mxu0 0.0
  %1074 = vmatprep.subr.mxu0 0.0
  %1075 = vmatpush1.msra.mxu0 0.0
  %1076 = vmatprep.subr.mxu0 0.0
  %1077 = vmatpush1.msra.mxu0 0.0
  %1078 = vmatprep.subr.mxu0 0.0
  %1079 = vmatpush1.msra.mxu0 0.0
  %1080 = vmatprep.subr.mxu0 0.0
  %1081 = vmatpush1.msra.mxu0 0.0
  %1082 = vmatprep.subr.mxu0 0.0
  %1083 = vmatpush1.msra.mxu0 0.0
  %1084 = vmatprep.subr.mxu0 0.0
  %1085 = vmatpush1.msra.mxu0 0.0
  %1086 = vmatprep.subr.mxu0 0.0
  %1087 = vmatpush1.msra.mxu0 0.0
  %1088 = vmatprep.subr.mxu0 0.0
  %1089 = vmatpush1.msra.mxu0 0.0
  %1090 = vmatprep.subr.mxu0 0.0
  %1091 = vmatpush1.msra.mxu0 0.0
  %1092 = vmatprep.subr.mxu0 0.0
  %1093 = vmatpush1.msra.mxu0 0.0
  %1094 = vmatprep.subr.mxu0 0.0
  %1095 = vmatpush1.msra.mxu0 0.0
  %1096 = vmatprep.mubr.f32.mxu0 0.0
  %1097 = vmatmul.mubr.f32.gmra.mrb[0].mxu0 %v1027
  %v1098 = vpop.f32.mrb[0].mxu0
  %v1099 = vadd.f32 0.0, %v1098
  %v1100 = vpop.f32.mrb[0].mxu0
  %1101 = vmatprep.mubr.f32.mxu0 0.0
  %1102 = vmatmul.mubr.f32.gmra.mrb[0].mxu0 %v1030
  %v1103 = vpop.f32.mrb[0].mxu0
  %v1104 = vadd.f32 0.0, %v1103
  %v1105 = vpop.f32.mrb[0].mxu0
  %1106 = vdwg.mxu0
  %v1108 = vsel %vm344, %v1099, 0
  %v1111 = vsel %vm344, %v1104, 0
  %1113 = vmatprep.subr.mxu0 0.0
  %1114 = vmatpush1.msra.mxu0 %v77
  %1115 = vmatprep.subr.mxu0 0.0
  %1116 = vmatpush1.msra.mxu0 %v78
  %1117 = vmatprep.subr.mxu0 0.0
  %1118 = vmatpush1.msra.mxu0 0.0
  %1119 = vmatprep.subr.mxu0 0.0
  %1120 = vmatpush1.msra.mxu0 0.0
  %1121 = vmatprep.subr.mxu0 0.0
  %1122 = vmatpush1.msra.mxu0 0.0
  %1123 = vmatprep.subr.mxu0 0.0
  %1124 = vmatpush1.msra.mxu0 0.0
  %1125 = vmatprep.subr.mxu0 0.0
  %1126 = vmatpush1.msra.mxu0 0.0
  %1127 = vmatprep.subr.mxu0 0.0
  %1128 = vmatpush1.msra.mxu0 0.0
  %1129 = vmatprep.subr.mxu0 0.0
  %1130 = vmatpush1.msra.mxu0 0.0
  %1131 = vmatprep.subr.mxu0 0.0
  %1132 = vmatpush1.msra.mxu0 0.0
  %1133 = vmatprep.subr.mxu0 0.0
  %1134 = vmatpush1.msra.mxu0 0.0
  %1135 = vmatprep.subr.mxu0 0.0
  %1136 = vmatpush1.msra.mxu0 0.0
  %1137 = vmatprep.subr.mxu0 0.0
  %1138 = vmatpush1.msra.mxu0 0.0
  %1139 = vmatprep.subr.mxu0 0.0
  %1140 = vmatpush1.msra.mxu0 0.0
  %1141 = vmatprep.subr.mxu0 0.0
  %1142 = vmatpush1.msra.mxu0 0.0
  %1143 = vmatprep.subr.mxu0 0.0
  %1144 = vmatpush1.msra.mxu0 0.0
  %1145 = vmatprep.subr.mxu0 0.0
  %1146 = vmatpush1.msra.mxu0 0.0
  %1147 = vmatprep.subr.mxu0 0.0
  %1148 = vmatpush1.msra.mxu0 0.0
  %1149 = vmatprep.subr.mxu0 0.0
  %1150 = vmatpush1.msra.mxu0 0.0
  %1151 = vmatprep.subr.mxu0 0.0
  %1152 = vmatpush1.msra.mxu0 0.0
  %1153 = vmatprep.subr.mxu0 0.0
  %1154 = vmatpush1.msra.mxu0 0.0
  %1155 = vmatprep.subr.mxu0 0.0
  %1156 = vmatpush1.msra.mxu0 0.0
  %1157 = vmatprep.subr.mxu0 0.0
  %1158 = vmatpush1.msra.mxu0 0.0
  %1159 = vmatprep.subr.mxu0 0.0
  %1160 = vmatpush1.msra.mxu0 0.0
  %1161 = vmatprep.subr.mxu0 0.0
  %1162 = vmatpush1.msra.mxu0 0.0
  %1163 = vmatprep.subr.mxu0 0.0
  %1164 = vmatpush1.msra.mxu0 0.0
  %1165 = vmatprep.subr.mxu0 0.0
  %1166 = vmatpush1.msra.mxu0 0.0
  %1167 = vmatprep.subr.mxu0 0.0
  %1168 = vmatpush1.msra.mxu0 0.0
  %1169 = vmatprep.subr.mxu0 0.0
  %1170 = vmatpush1.msra.mxu0 0.0
  %1171 = vmatprep.subr.mxu0 0.0
  %1172 = vmatpush1.msra.mxu0 0.0
  %1173 = vmatprep.subr.mxu0 0.0
  %1174 = vmatpush1.msra.mxu0 0.0
  %1175 = vmatprep.subr.mxu0 0.0
  %1176 = vmatpush1.msra.mxu0 0.0
  %1177 = vmatprep.mubr.f32.mxu0 0.0
  %1178 = vmatmul.mubr.f32.gmra.mrb[0].mxu0 %v1108
  %v1179 = vpop.f32.mrb[0].mxu0
  %v1180 = vadd.f32 0.0, %v1179
  %v1181 = vpop.f32.mrb[0].mxu0
  %1182 = vmatprep.mubr.f32.mxu0 0.0
  %1183 = vmatmul.mubr.f32.gmra.mrb[0].mxu0 %v1111
  %v1184 = vpop.f32.mrb[0].mxu0
  %v1185 = vadd.f32 0.0, %v1184
  %v1186 = vpop.f32.mrb[0].mxu0
  %1187 = vdwg.mxu0
  %v1188 = vadd.f32 %v895, %v1180
  %v1189 = vadd.f32 %v900, %v1185
  %1190 = vrot.lane.b32.xlu0 %v336, 80
  %v1191 = vpop.permute.xlu0 %1190
  %1192 = vrot.lane.b32.xlu0 %v337, 80
  %v1193 = vpop.permute.xlu0 %1192
  %1194 = vrot.lane.b32.xlu0 %v336, 16
  %v1195 = vpop.permute.xlu0 %1194
  %1196 = vrot.lane.b32.xlu0 %v337, 16
  %v1197 = vpop.permute.xlu0 %1196
  %v1198 = vsel %vm344, %v1191, 0
  %v1200 = vsel %vm344, %v1193, 0
  %v1202 = vsel %vm344, %v1195, 0
  %v1204 = vsel %vm344, %v1197, 0
  %1206 = vmatprep.subr.mxu0 0.0
  %1207 = vmatpush1.xpose.msra.mxu0 %v1202
  %1208 = vmatprep.subr.mxu0 0.0
  %1209 = vmatpush1.xpose.msra.mxu0 %v1204
  %1210 = vmatprep.subr.mxu0 0.0
  %1211 = vmatpush1.xpose.msra.mxu0 0.0
  %1212 = vmatprep.subr.mxu0 0.0
  %1213 = vmatpush1.xpose.msra.mxu0 0.0
  %1214 = vmatprep.subr.mxu0 0.0
  %1215 = vmatpush1.xpose.msra.mxu0 0.0
  %1216 = vmatprep.subr.mxu0 0.0
  %1217 = vmatpush1.xpose.msra.mxu0 0.0
  %1218 = vmatprep.subr.mxu0 0.0
  %1219 = vmatpush1.xpose.msra.mxu0 0.0
  %1220 = vmatprep.subr.mxu0 0.0
  %1221 = vmatpush1.xpose.msra.mxu0 0.0
  %1222 = vmatprep.subr.mxu0 0.0
  %1223 = vmatpush1.xpose.msra.mxu0 0.0
  %1224 = vmatprep.subr.mxu0 0.0
  %1225 = vmatpush1.xpose.msra.mxu0 0.0
  %1226 = vmatprep.subr.mxu0 0.0
  %1227 = vmatpush1.xpose.msra.mxu0 0.0
  %1228 = vmatprep.subr.mxu0 0.0
  %1229 = vmatpush1.xpose.msra.mxu0 0.0
  %1230 = vmatprep.subr.mxu0 0.0
  %1231 = vmatpush1.xpose.msra.mxu0 0.0
  %1232 = vmatprep.subr.mxu0 0.0
  %1233 = vmatpush1.xpose.msra.mxu0 0.0
  %1234 = vmatprep.subr.mxu0 0.0
  %1235 = vmatpush1.xpose.msra.mxu0 0.0
  %1236 = vmatprep.subr.mxu0 0.0
  %1237 = vmatpush1.xpose.msra.mxu0 0.0
  %1238 = vmatprep.subr.mxu0 0.0
  %1239 = vmatpush1.xpose.msra.mxu0 0.0
  %1240 = vmatprep.subr.mxu0 0.0
  %1241 = vmatpush1.xpose.msra.mxu0 0.0
  %1242 = vmatprep.subr.mxu0 0.0
  %1243 = vmatpush1.xpose.msra.mxu0 0.0
  %1244 = vmatprep.subr.mxu0 0.0
  %1245 = vmatpush1.xpose.msra.mxu0 0.0
  %1246 = vmatprep.subr.mxu0 0.0
  %1247 = vmatpush1.xpose.msra.mxu0 0.0
  %1248 = vmatprep.subr.mxu0 0.0
  %1249 = vmatpush1.xpose.msra.mxu0 0.0
  %1250 = vmatprep.subr.mxu0 0.0
  %1251 = vmatpush1.xpose.msra.mxu0 0.0
  %1252 = vmatprep.subr.mxu0 0.0
  %1253 = vmatpush1.xpose.msra.mxu0 0.0
  %1254 = vmatprep.subr.mxu0 0.0
  %1255 = vmatpush1.xpose.msra.mxu0 0.0
  %1256 = vmatprep.subr.mxu0 0.0
  %1257 = vmatpush1.xpose.msra.mxu0 0.0
  %1258 = vmatprep.subr.mxu0 0.0
  %1259 = vmatpush1.xpose.msra.mxu0 0.0
  %1260 = vmatprep.subr.mxu0 0.0
  %1261 = vmatpush1.xpose.msra.mxu0 0.0
  %1262 = vmatprep.subr.mxu0 0.0
  %1263 = vmatpush1.xpose.msra.mxu0 0.0
  %1264 = vmatprep.subr.mxu0 0.0
  %1265 = vmatpush1.xpose.msra.mxu0 0.0
  %1266 = vmatprep.subr.mxu0 0.0
  %1267 = vmatpush1.xpose.msra.mxu0 0.0
  %1268 = vmatprep.subr.mxu0 0.0
  %1269 = vmatpush1.xpose.msra.mxu0 0.0
  %1270 = vmatprep.mubr.f32.mxu0 0.0
  %1271 = vmatmul.mubr.f32.gmra.mrb[0].mxu0 %v1198
  %v1272 = vpop.f32.mrb[0].mxu0
  %v1273 = vadd.f32 0.0, %v1272
  %v1274 = vpop.f32.mrb[0].mxu0
  %1275 = vmatprep.mubr.f32.mxu0 0.0
  %1276 = vmatmul.mubr.f32.gmra.mrb[0].mxu0 %v1200
  %v1277 = vpop.f32.mrb[0].mxu0
  %v1278 = vadd.f32 0.0, %v1277
  %v1279 = vpop.f32.mrb[0].mxu0
  %1280 = vdwg.mxu0
  %v1281 = vmul.f32 %v1273, 0.25
  %v1282 = vmul.f32 %v1278, 0.25
  %v1283 = vadd.f32 %v1281, %v43
  %v1284 = vadd.f32 %v1282, %v44
  %v1285 = vsel %vm344, %v1283, -inf
  %1286 = vmax.xlane.f32.xlu0 %v1285
  %v1287 = vpop.xlane.xlu0 %1286
  %v1288 = vsel %vm344, %v1284, -inf
  %1289 = vmax.xlane.f32.xlu0 %v1288
  %v1290 = vpop.xlane.xlu0 %1289
  %v1291 = vsub.f32 %v1283, %v1287
  %v1292 = vsub.f32 %v1284, %v1290
  %v1293 = vmul.f32 %v1291, 1.442695
  %v1294 = vpow.pop %v1293
  %v1295 = vmul.f32 %v1292, 1.442695
  %v1296 = vpow.pop %v1295
  %v1297 = vsel %vm344, %v1294, 0.0
  %1298 = vadd.xlane.f32.xlu0 %v1297
  %v1299 = vpop.xlane.xlu0 %1298
  %v1300 = vsel %vm344, %v1296, 0.0
  %1301 = vadd.xlane.f32.xlu0 %v1300
  %v1302 = vpop.xlane.xlu0 %1301
  %v1303 = vrcp.pop %v1299
  %v1304 = vrcp.pop %v1302
  %v1305 = vmul.f32 %v1294, %v1303
  %v1306 = vmul.f32 %v1296, %v1304
  %1307 = vrot.lane.b32.xlu0 %v324, 80
  %v1308 = vpop.permute.xlu0 %1307
  %1309 = vrot.lane.b32.xlu0 %v329, 80
  %v1310 = vpop.permute.xlu0 %1309
  %v1314 = vsel %vm344, %v1305, 0
  %v1317 = vsel %vm344, %v1306, 0
  %1319 = vmatprep.subr.mxu0 0.0
  %1320 = vmatpush1.msra.mxu0 %v1308
  %1321 = vmatprep.subr.mxu0 0.0
  %1322 = vmatpush1.msra.mxu0 %v1310
  %1323 = vmatprep.subr.mxu0 0.0
  %1324 = vmatpush1.msra.mxu0 0.0
  %1325 = vmatprep.subr.mxu0 0.0
  %1326 = vmatpush1.msra.mxu0 0.0
  %1327 = vmatprep.subr.mxu0 0.0
  %1328 = vmatpush1.msra.mxu0 0.0
  %1329 = vmatprep.subr.mxu0 0.0
  %1330 = vmatpush1.msra.mxu0 0.0
  %1331 = vmatprep.subr.mxu0 0.0
  %1332 = vmatpush1.msra.mxu0 0.0
  %1333 = vmatprep.subr.mxu0 0.0
  %1334 = vmatpush1.msra.mxu0 0.0
  %1335 = vmatprep.subr.mxu0 0.0
  %1336 = vmatpush1.msra.mxu0 0.0
  %1337 = vmatprep.subr.mxu0 0.0
  %1338 = vmatpush1.msra.mxu0 0.0
  %1339 = vmatprep.subr.mxu0 0.0
  %1340 = vmatpush1.msra.mxu0 0.0
  %1341 = vmatprep.subr.mxu0 0.0
  %1342 = vmatpush1.msra.mxu0 0.0
  %1343 = vmatprep.subr.mxu0 0.0
  %1344 = vmatpush1.msra.mxu0 0.0
  %1345 = vmatprep.subr.mxu0 0.0
  %1346 = vmatpush1.msra.mxu0 0.0
  %1347 = vmatprep.subr.mxu0 0.0
  %1348 = vmatpush1.msra.mxu0 0.0
  %1349 = vmatprep.subr.mxu0 0.0
  %1350 = vmatpush1.msra.mxu0 0.0
  %1351 = vmatprep.subr.mxu0 0.0
  %1352 = vmatpush1.msra.mxu0 0.0
  %1353 = vmatprep.subr.mxu0 0.0
  %1354 = vmatpush1.msra.mxu0 0.0
  %1355 = vmatprep.subr.mxu0 0.0
  %1356 = vmatpush1.msra.mxu0 0.0
  %1357 = vmatprep.subr.mxu0 0.0
  %1358 = vmatpush1.msra.mxu0 0.0
  %1359 = vmatprep.subr.mxu0 0.0
  %1360 = vmatpush1.msra.mxu0 0.0
  %1361 = vmatprep.subr.mxu0 0.0
  %1362 = vmatpush1.msra.mxu0 0.0
  %1363 = vmatprep.subr.mxu0 0.0
  %1364 = vmatpush1.msra.mxu0 0.0
  %1365 = vmatprep.subr.mxu0 0.0
  %1366 = vmatpush1.msra.mxu0 0.0
  %1367 = vmatprep.subr.mxu0 0.0
  %1368 = vmatpush1.msra.mxu0 0.0
  %1369 = vmatprep.subr.mxu0 0.0
  %1370 = vmatpush1.msra.mxu0 0.0
  %1371 = vmatprep.subr.mxu0 0.0
  %1372 = vmatpush1.msra.mxu0 0.0
  %1373 = vmatprep.subr.mxu0 0.0
  %1374 = vmatpush1.msra.mxu0 0.0
  %1375 = vmatprep.subr.mxu0 0.0
  %1376 = vmatpush1.msra.mxu0 0.0
  %1377 = vmatprep.subr.mxu0 0.0
  %1378 = vmatpush1.msra.mxu0 0.0
  %1379 = vmatprep.subr.mxu0 0.0
  %1380 = vmatpush1.msra.mxu0 0.0
  %1381 = vmatprep.subr.mxu0 0.0
  %1382 = vmatpush1.msra.mxu0 0.0
  %1383 = vmatprep.mubr.f32.mxu0 0.0
  %1384 = vmatmul.mubr.f32.gmra.mrb[0].mxu0 %v1314
  %v1385 = vpop.f32.mrb[0].mxu0
  %v1386 = vadd.f32 0.0, %v1385
  %v1387 = vpop.f32.mrb[0].mxu0
  %1388 = vmatprep.mubr.f32.mxu0 0.0
  %1389 = vmatmul.mubr.f32.gmra.mrb[0].mxu0 %v1317
  %v1390 = vpop.f32.mrb[0].mxu0
  %v1391 = vadd.f32 0.0, %v1390
  %v1392 = vpop.f32.mrb[0].mxu0
  %1393 = vdwg.mxu0
  %v1395 = vsel %vm344, %v1386, 0
  %v1398 = vsel %vm344, %v1391, 0
  %1400 = vmatprep.subr.mxu0 0.0
  %1401 = vmatpush1.msra.mxu0 %v79
  %1402 = vmatprep.subr.mxu0 0.0
  %1403 = vmatpush1.msra.mxu0 %v80
  %1404 = vmatprep.subr.mxu0 0.0
  %1405 = vmatpush1.msra.mxu0 0.0
  %1406 = vmatprep.subr.mxu0 0.0
  %1407 = vmatpush1.msra.mxu0 0.0
  %1408 = vmatprep.subr.mxu0 0.0
  %1409 = vmatpush1.msra.mxu0 0.0
  %1410 = vmatprep.subr.mxu0 0.0
  %1411 = vmatpush1.msra.mxu0 0.0
  %1412 = vmatprep.subr.mxu0 0.0
  %1413 = vmatpush1.msra.mxu0 0.0
  %1414 = vmatprep.subr.mxu0 0.0
  %1415 = vmatpush1.msra.mxu0 0.0
  %1416 = vmatprep.subr.mxu0 0.0
  %1417 = vmatpush1.msra.mxu0 0.0
  %1418 = vmatprep.subr.mxu0 0.0
  %1419 = vmatpush1.msra.mxu0 0.0
  %1420 = vmatprep.subr.mxu0 0.0
  %1421 = vmatpush1.msra.mxu0 0.0
  %1422 = vmatprep.subr.mxu0 0.0
  %1423 = vmatpush1.msra.mxu0 0.0
  %1424 = vmatprep.subr.mxu0 0.0
  %1425 = vmatpush1.msra.mxu0 0.0
  %1426 = vmatprep.subr.mxu0 0.0
  %1427 = vmatpush1.msra.mxu0 0.0
  %1428 = vmatprep.subr.mxu0 0.0
  %1429 = vmatpush1.msra.mxu0 0.0
  %1430 = vmatprep.subr.mxu0 0.0
  %1431 = vmatpush1.msra.mxu0 0.0
  %1432 = vmatprep.subr.mxu0 0.0
  %1433 = vmatpush1.msra.mxu0 0.0
  %1434 = vmatprep.subr.mxu0 0.0
  %1435 = vmatpush1.msra.mxu0 0.0
  %1436 = vmatprep.subr.mxu0 0.0
  %1437 = vmatpush1.msra.mxu0 0.0
  %1438 = vmatprep.subr.mxu0 0.0
  %1439 = vmatpush1.msra.mxu0 0.0
  %1440 = vmatprep.subr.mxu0 0.0
  %1441 = vmatpush1.msra.mxu0 0.0
  %1442 = vmatprep.subr.mxu0 0.0
  %1443 = vmatpush1.msra.mxu0 0.0
  %1444 = vmatprep.subr.mxu0 0.0
  %1445 = vmatpush1.msra.mxu0 0.0
  %1446 = vmatprep.subr.mxu0 0.0
  %1447 = vmatpush1.msra.mxu0 0.0
  %1448 = vmatprep.subr.mxu0 0.0
  %1449 = vmatpush1.msra.mxu0 0.0
  %1450 = vmatprep.subr.mxu0 0.0
  %1451 = vmatpush1.msra.mxu0 0.0
  %1452 = vmatprep.subr.mxu0 0.0
  %1453 = vmatpush1.msra.mxu0 0.0
  %1454 = vmatprep.subr.mxu0 0.0
  %1455 = vmatpush1.msra.mxu0 0.0
  %1456 = vmatprep.subr.mxu0 0.0
  %1457 = vmatpush1.msra.mxu0 0.0
  %1458 = vmatprep.subr.mxu0 0.0
  %1459 = vmatpush1.msra.mxu0 0.0
  %1460 = vmatprep.subr.mxu0 0.0
  %1461 = vmatpush1.msra.mxu0 0.0
  %1462 = vmatprep.subr.mxu0 0.0
  %1463 = vmatpush1.msra.mxu0 0.0
  %1464 = vmatprep.mubr.f32.mxu0 0.0
  %1465 = vmatmul.mubr.f32.gmra.mrb[0].mxu0 %v1395
  %v1466 = vpop.f32.mrb[0].mxu0
  %v1467 = vadd.f32 0.0, %v1466
  %v1468 = vpop.f32.mrb[0].mxu0
  %1469 = vmatprep.mubr.f32.mxu0 0.0
  %1470 = vmatmul.mubr.f32.gmra.mrb[0].mxu0 %v1398
  %v1471 = vpop.f32.mrb[0].mxu0
  %v1472 = vadd.f32 0.0, %v1471
  %v1473 = vpop.f32.mrb[0].mxu0
  %1474 = vdwg.mxu0
  %v1475 = vadd.f32 %v1188, %v1467
  %v1476 = vadd.f32 %v1189, %v1472
  %v1477 = vadd.f32 %v172, %v1475
  %v1478 = vadd.f32 %v173, %v1476
  %v1479 = vmul.f32 %v1477, %v1477
  %v1480 = vmul.f32 %v1478, %v1478
  %v1481 = vsel %vm150, %v1479, 0.0
  %1482 = vadd.xlane.f32.xlu0 %v1481
  %v1483 = vpop.xlane.xlu0 %1482
  %v1484 = vsel %vm150, %v1480, 0.0
  %1485 = vadd.xlane.f32.xlu0 %v1484
  %v1486 = vpop.xlane.xlu0 %1485
  %v1487 = vmul.f32 %v1483, %v157
  %v1488 = vmul.f32 %v1486, %v157
  %v1489 = vadd.f32 %v1487, 1e-06
  %v1490 = vadd.f32 %v1488, 1e-06
  %v1491 = vrsqrt.pop %v1489
  %v1492 = vrsqrt.pop %v1490
  %v1493 = vmul.f32 %v1477, %v1491
  %v1494 = vmul.f32 %v1478, %v1492
  %v1496 = vlaneseq
  %v1497 = vshrl.u32 %v1496, 7
  %v1498 = vsub.s32 0, %v1497
  %v1499 = vrot.slane %v82, %v1498
  %v1501 = vmul.f32 %v1493, %v1499
  %v1502 = vmul.f32 %v1494, %v1499
  %v1503 = vmul.f32 %v1501, %v1501
  %v1504 = vmul.f32 %v1502, %v1502
  %v1505 = vsel %vm150, %v1503, 0.0
  %1506 = vadd.xlane.f32.xlu0 %v1505
  %v1507 = vpop.xlane.xlu0 %1506
  %v1508 = vsel %vm150, %v1504, 0.0
  %1509 = vadd.xlane.f32.xlu0 %v1508
  %v1510 = vpop.xlane.xlu0 %1509
  %v1511 = vmul.f32 %v1507, %v157
  %v1512 = vmul.f32 %v1510, %v157
  %v1513 = vadd.f32 %v1511, 1e-06
  %v1514 = vadd.f32 %v1512, 1e-06
  %v1515 = vrsqrt.pop %v1513
  %v1516 = vrsqrt.pop %v1514
  %v1517 = vmul.f32 %v1501, %v1515
  %v1518 = vmul.f32 %v1502, %v1516
  %v1520 = vlaneseq
  %v1521 = vshrl.u32 %v1520, 7
  %v1522 = vsub.s32 0, %v1521
  %v1523 = vrot.slane %v83, %v1522
  %v1525 = vmul.f32 %v1517, %v1523
  %v1526 = vmul.f32 %v1518, %v1523
  %v1528 = vsel %vm150, %v1525, 0
  %v1531 = vsel %vm150, %v1526, 0
  %1533 = vmatprep.subr.mxu0 %v85
  %1534 = vmatpush1.msra.mxu0 %v84
  %1535 = vmatprep.subr.mxu0 %v89
  %1536 = vmatpush1.msra.mxu0 %v88
  %1537 = vmatprep.subr.mxu0 %v93
  %1538 = vmatpush1.msra.mxu0 %v92
  %1539 = vmatprep.subr.mxu0 %v97
  %1540 = vmatpush1.msra.mxu0 %v96
  %1541 = vmatprep.subr.mxu0 %v101
  %1542 = vmatpush1.msra.mxu0 %v100
  %1543 = vmatprep.subr.mxu0 %v105
  %1544 = vmatpush1.msra.mxu0 %v104
  %1545 = vmatprep.subr.mxu0 %v109
  %1546 = vmatpush1.msra.mxu0 %v108
  %1547 = vmatprep.subr.mxu0 %v113
  %1548 = vmatpush1.msra.mxu0 %v112
  %1549 = vmatprep.subr.mxu0 0.0
  %1550 = vmatpush1.msra.mxu0 0.0
  %1551 = vmatprep.subr.mxu0 0.0
  %1552 = vmatpush1.msra.mxu0 0.0
  %1553 = vmatprep.subr.mxu0 0.0
  %1554 = vmatpush1.msra.mxu0 0.0
  %1555 = vmatprep.subr.mxu0 0.0
  %1556 = vmatpush1.msra.mxu0 0.0
  %1557 = vmatprep.subr.mxu0 0.0
  %1558 = vmatpush1.msra.mxu0 0.0
  %1559 = vmatprep.subr.mxu0 0.0
  %1560 = vmatpush1.msra.mxu0 0.0
  %1561 = vmatprep.subr.mxu0 0.0
  %1562 = vmatpush1.msra.mxu0 0.0
  %1563 = vmatprep.subr.mxu0 0.0
  %1564 = vmatpush1.msra.mxu0 0.0
  %1565 = vmatprep.subr.mxu0 0.0
  %1566 = vmatpush1.msra.mxu0 0.0
  %1567 = vmatprep.subr.mxu0 0.0
  %1568 = vmatpush1.msra.mxu0 0.0
  %1569 = vmatprep.subr.mxu0 0.0
  %1570 = vmatpush1.msra.mxu0 0.0
  %1571 = vmatprep.subr.mxu0 0.0
  %1572 = vmatpush1.msra.mxu0 0.0
  %1573 = vmatprep.subr.mxu0 0.0
  %1574 = vmatpush1.msra.mxu0 0.0
  %1575 = vmatprep.subr.mxu0 0.0
  %1576 = vmatpush1.msra.mxu0 0.0
  %1577 = vmatprep.subr.mxu0 0.0
  %1578 = vmatpush1.msra.mxu0 0.0
  %1579 = vmatprep.subr.mxu0 0.0
  %1580 = vmatpush1.msra.mxu0 0.0
  %1581 = vmatprep.subr.mxu0 0.0
  %1582 = vmatpush1.msra.mxu0 0.0
  %1583 = vmatprep.subr.mxu0 0.0
  %1584 = vmatpush1.msra.mxu0 0.0
  %1585 = vmatprep.subr.mxu0 0.0
  %1586 = vmatpush1.msra.mxu0 0.0
  %1587 = vmatprep.subr.mxu0 0.0
  %1588 = vmatpush1.msra.mxu0 0.0
  %1589 = vmatprep.subr.mxu0 0.0
  %1590 = vmatpush1.msra.mxu0 0.0
  %1591 = vmatprep.subr.mxu0 0.0
  %1592 = vmatpush1.msra.mxu0 0.0
  %1593 = vmatprep.subr.mxu0 0.0
  %1594 = vmatpush1.msra.mxu0 0.0
  %1595 = vmatprep.subr.mxu0 0.0
  %1596 = vmatpush1.msra.mxu0 0.0
  %1597 = vmatprep.mubr.f32.mxu0 0.0
  %1598 = vmatmul.mubr.f32.gmra.mrb[0].mxu0 %v1528
  %v1599 = vpop.f32.mrb[0].mxu0
  %v1600 = vadd.f32 0.0, %v1599
  %v1601 = vpop.f32.mrb[0].mxu0
  %v1602 = vadd.f32 0.0, %v1601
  %1603 = vmatprep.mubr.f32.mxu0 0.0
  %1604 = vmatmul.mubr.f32.gmra.mrb[0].mxu0 %v1531
  %v1605 = vpop.f32.mrb[0].mxu0
  %v1606 = vadd.f32 0.0, %v1605
  %v1607 = vpop.f32.mrb[0].mxu0
  %v1608 = vadd.f32 0.0, %v1607
  %1609 = vdwg.mxu0
  %1610 = vmatprep.subr.mxu0 %v87
  %1611 = vmatpush1.msra.mxu0 %v86
  %1612 = vmatprep.subr.mxu0 %v91
  %1613 = vmatpush1.msra.mxu0 %v90
  %1614 = vmatprep.subr.mxu0 %v95
  %1615 = vmatpush1.msra.mxu0 %v94
  %1616 = vmatprep.subr.mxu0 %v99
  %1617 = vmatpush1.msra.mxu0 %v98
  %1618 = vmatprep.subr.mxu0 %v103
  %1619 = vmatpush1.msra.mxu0 %v102
  %1620 = vmatprep.subr.mxu0 %v107
  %1621 = vmatpush1.msra.mxu0 %v106
  %1622 = vmatprep.subr.mxu0 %v111
  %1623 = vmatpush1.msra.mxu0 %v110
  %1624 = vmatprep.subr.mxu0 %v115
  %1625 = vmatpush1.msra.mxu0 %v114
  %1626 = vmatprep.subr.mxu0 0.0
  %1627 = vmatpush1.msra.mxu0 0.0
  %1628 = vmatprep.subr.mxu0 0.0
  %1629 = vmatpush1.msra.mxu0 0.0
  %1630 = vmatprep.subr.mxu0 0.0
  %1631 = vmatpush1.msra.mxu0 0.0
  %1632 = vmatprep.subr.mxu0 0.0
  %1633 = vmatpush1.msra.mxu0 0.0
  %1634 = vmatprep.subr.mxu0 0.0
  %1635 = vmatpush1.msra.mxu0 0.0
  %1636 = vmatprep.subr.mxu0 0.0
  %1637 = vmatpush1.msra.mxu0 0.0
  %1638 = vmatprep.subr.mxu0 0.0
  %1639 = vmatpush1.msra.mxu0 0.0
  %1640 = vmatprep.subr.mxu0 0.0
  %1641 = vmatpush1.msra.mxu0 0.0
  %1642 = vmatprep.subr.mxu0 0.0
  %1643 = vmatpush1.msra.mxu0 0.0
  %1644 = vmatprep.subr.mxu0 0.0
  %1645 = vmatpush1.msra.mxu0 0.0
  %1646 = vmatprep.subr.mxu0 0.0
  %1647 = vmatpush1.msra.mxu0 0.0
  %1648 = vmatprep.subr.mxu0 0.0
  %1649 = vmatpush1.msra.mxu0 0.0
  %1650 = vmatprep.subr.mxu0 0.0
  %1651 = vmatpush1.msra.mxu0 0.0
  %1652 = vmatprep.subr.mxu0 0.0
  %1653 = vmatpush1.msra.mxu0 0.0
  %1654 = vmatprep.subr.mxu0 0.0
  %1655 = vmatpush1.msra.mxu0 0.0
  %1656 = vmatprep.subr.mxu0 0.0
  %1657 = vmatpush1.msra.mxu0 0.0
  %1658 = vmatprep.subr.mxu0 0.0
  %1659 = vmatpush1.msra.mxu0 0.0
  %1660 = vmatprep.subr.mxu0 0.0
  %1661 = vmatpush1.msra.mxu0 0.0
  %1662 = vmatprep.subr.mxu0 0.0
  %1663 = vmatpush1.msra.mxu0 0.0
  %1664 = vmatprep.subr.mxu0 0.0
  %1665 = vmatpush1.msra.mxu0 0.0
  %1666 = vmatprep.subr.mxu0 0.0
  %1667 = vmatpush1.msra.mxu0 0.0
  %1668 = vmatprep.subr.mxu0 0.0
  %1669 = vmatpush1.msra.mxu0 0.0
  %1670 = vmatprep.subr.mxu0 0.0
  %1671 = vmatpush1.msra.mxu0 0.0
  %1672 = vmatprep.subr.mxu0 0.0
  %1673 = vmatpush1.msra.mxu0 0.0
  %1674 = vmatprep.mubr.f32.mxu0 0.0
  %1675 = vmatmul.mubr.f32.gmra.mrb[0].mxu0 %v1528
  %v1676 = vpop.f32.mrb[0].mxu0
  %v1677 = vadd.f32 0.0, %v1676
  %v1678 = vpop.f32.mrb[0].mxu0
  %v1679 = vadd.f32 0.0, %v1678
  %1680 = vmatprep.mubr.f32.mxu0 0.0
  %1681 = vmatmul.mubr.f32.gmra.mrb[0].mxu0 %v1531
  %v1682 = vpop.f32.mrb[0].mxu0
  %v1683 = vadd.f32 0.0, %v1682
  %v1684 = vpop.f32.mrb[0].mxu0
  %v1685 = vadd.f32 0.0, %v1684
  %1686 = vdwg.mxu0
  %v1687 = vxor.u32 %v1600, 2147483648
  %v1688 = vxor.u32 %v1602, 2147483648
  %v1689 = vxor.u32 %v1606, 2147483648
  %v1690 = vxor.u32 %v1608, 2147483648
  %v1691 = vmul.f32 %v1687, 1.442695
  %v1692 = vpow.pop %v1691
  %v1693 = vmul.f32 %v1688, 1.442695
  %v1694 = vpow.pop %v1693
  %v1695 = vmul.f32 %v1689, 1.442695
  %v1696 = vpow.pop %v1695
  %v1697 = vmul.f32 %v1690, 1.442695
  %v1698 = vpow.pop %v1697
  %v1699 = vadd.f32 %v1692, 1.0
  %v1700 = vadd.f32 %v1694, 1.0
  %v1701 = vadd.f32 %v1696, 1.0
  %v1702 = vadd.f32 %v1698, 1.0
  %v1703 = vrcp.pop %v1699
  %v1704 = vmul.f32 1.0, %v1703
  %v1705 = vrcp.pop %v1700
  %v1706 = vmul.f32 1.0, %v1705
  %v1707 = vrcp.pop %v1701
  %v1708 = vmul.f32 1.0, %v1707
  %v1709 = vrcp.pop %v1702
  %v1710 = vmul.f32 1.0, %v1709
  %v1711 = vmul.f32 %v1600, %v1704
  %v1712 = vmul.f32 %v1602, %v1706
  %v1713 = vmul.f32 %v1606, %v1708
  %v1714 = vmul.f32 %v1608, %v1710
  %v1715 = vmul.f32 %v1711, %v1677
  %v1716 = vmul.f32 %v1712, %v1679
  %v1717 = vmul.f32 %v1713, %v1683
  %v1718 = vmul.f32 %v1714, %v1685
  %1719 = vmatprep.subr.mxu0 0.0
  %1720 = vmatpush1.msra.mxu0 %v116
  %1721 = vmatprep.subr.mxu0 0.0
  %1722 = vmatpush1.msra.mxu0 %v117
  %1723 = vmatprep.subr.mxu0 0.0
  %1724 = vmatpush1.msra.mxu0 %v118
  %1725 = vmatprep.subr.mxu0 0.0
  %1726 = vmatpush1.msra.mxu0 %v119
  %1727 = vmatprep.subr.mxu0 0.0
  %1728 = vmatpush1.msra.mxu0 %v120
  %1729 = vmatprep.subr.mxu0 0.0
  %1730 = vmatpush1.msra.mxu0 %v121
  %1731 = vmatprep.subr.mxu0 0.0
  %1732 = vmatpush1.msra.mxu0 %v122
  %1733 = vmatprep.subr.mxu0 0.0
  %1734 = vmatpush1.msra.mxu0 %v123
  %1735 = vmatprep.subr.mxu0 0.0
  %1736 = vmatpush1.msra.mxu0 %v124
  %1737 = vmatprep.subr.mxu0 0.0
  %1738 = vmatpush1.msra.mxu0 %v125
  %1739 = vmatprep.subr.mxu0 0.0
  %1740 = vmatpush1.msra.mxu0 %v126
  %1741 = vmatprep.subr.mxu0 0.0
  %1742 = vmatpush1.msra.mxu0 %v127
  %1743 = vmatprep.subr.mxu0 0.0
  %1744 = vmatpush1.msra.mxu0 %v128
  %1745 = vmatprep.subr.mxu0 0.0
  %1746 = vmatpush1.msra.mxu0 %v129
  %1747 = vmatprep.subr.mxu0 0.0
  %1748 = vmatpush1.msra.mxu0 %v130
  %1749 = vmatprep.subr.mxu0 0.0
  %1750 = vmatpush1.msra.mxu0 %v131
  %1751 = vmatprep.subr.mxu0 0.0
  %1752 = vmatpush1.msra.mxu0 %v132
  %1753 = vmatprep.subr.mxu0 0.0
  %1754 = vmatpush1.msra.mxu0 %v133
  %1755 = vmatprep.subr.mxu0 0.0
  %1756 = vmatpush1.msra.mxu0 %v134
  %1757 = vmatprep.subr.mxu0 0.0
  %1758 = vmatpush1.msra.mxu0 %v135
  %1759 = vmatprep.subr.mxu0 0.0
  %1760 = vmatpush1.msra.mxu0 %v136
  %1761 = vmatprep.subr.mxu0 0.0
  %1762 = vmatpush1.msra.mxu0 %v137
  %1763 = vmatprep.subr.mxu0 0.0
  %1764 = vmatpush1.msra.mxu0 %v138
  %1765 = vmatprep.subr.mxu0 0.0
  %1766 = vmatpush1.msra.mxu0 %v139
  %1767 = vmatprep.subr.mxu0 0.0
  %1768 = vmatpush1.msra.mxu0 %v140
  %1769 = vmatprep.subr.mxu0 0.0
  %1770 = vmatpush1.msra.mxu0 %v141
  %1771 = vmatprep.subr.mxu0 0.0
  %1772 = vmatpush1.msra.mxu0 %v142
  %1773 = vmatprep.subr.mxu0 0.0
  %1774 = vmatpush1.msra.mxu0 %v143
  %1775 = vmatprep.subr.mxu0 0.0
  %1776 = vmatpush1.msra.mxu0 %v144
  %1777 = vmatprep.subr.mxu0 0.0
  %1778 = vmatpush1.msra.mxu0 %v145
  %1779 = vmatprep.subr.mxu0 0.0
  %1780 = vmatpush1.msra.mxu0 %v146
  %1781 = vmatprep.subr.mxu0 0.0
  %1782 = vmatpush1.msra.mxu0 %v147
  %1783 = vmatprep.mubr.f32.mxu0 %v1716
  %1784 = vmatmul.mubr.f32.gmra.mrb[0].mxu0 %v1715
  %v1785 = vpop.f32.mrb[0].mxu0
  %v1786 = vadd.f32 0.0, %v1785
  %v1787 = vpop.f32.mrb[0].mxu0
  %1788 = vmatprep.mubr.f32.mxu0 %v1718
  %1789 = vmatmul.mubr.f32.gmra.mrb[0].mxu0 %v1717
  %v1790 = vpop.f32.mrb[0].mxu0
  %v1791 = vadd.f32 0.0, %v1790
  %v1792 = vpop.f32.mrb[0].mxu0
  %1793 = vdwg.mxu0
  %v1794 = vadd.f32 %v1501, %v1786
  %v1795 = vadd.f32 %v1502, %v1791
  %v1796 = vld [vmem:[%s11] sm:$0x1]
  %v1797 = vmul.f32 %v1794, %v1794
  %v1798 = vmul.f32 %v1795, %v1795
  %v1799 = vsel %vm150, %v1797, 0.0
  %1800 = vadd.xlane.f32.xlu0 %v1799
  %v1801 = vpop.xlane.xlu0 %1800
  %v1802 = vsel %vm150, %v1798, 0.0
  %1803 = vadd.xlane.f32.xlu0 %v1802
  %v1804 = vpop.xlane.xlu0 %1803
  %v1805 = vmul.f32 %v1801, %v157
  %v1806 = vmul.f32 %v1804, %v157
  %v1807 = vadd.f32 %v1805, 1e-06
  %v1808 = vadd.f32 %v1806, 1e-06
  %v1809 = vrsqrt.pop %v1807
  %v1810 = vrsqrt.pop %v1808
  %v1811 = vmul.f32 %v1794, %v1809
  %v1812 = vmul.f32 %v1795, %v1810
  %v1814 = vlaneseq
  %v1815 = vshrl.u32 %v1814, 7
  %v1816 = vsub.s32 0, %v1815
  %v1817 = vrot.slane %v1796, %v1816
  %v1819 = vmul.f32 %v1811, %v1817
  %v1820 = vmul.f32 %v1812, %v1817
  %1822 = vrot.lane.b32.xlu0 %v1820, 64
  %v1823 = vpop.permute.xlu0 %1822
  %v1825 = vsel %vm150, %v1819, %v1823
  %1826 = vst [vmem:[%s12] sm:$0xff] %v1825
  // Predicated region
  $region50: #{decoder_forward.1} parent=0 // pred_check
    _
  $region51: #{decoder_forward.1} parent=0 // pred_check_branch
    %1828 = sbr.rel (0) target = $region53
  $region52: #{decoder_forward.1} parent=0 // pred_region
    _
  $region53: #{decoder_forward.1} parent=0 // pred_fallthru
    _
  // Predicated region
  $region54: #{decoder_forward.1} parent=0 // pred_check
    _
  $region55: #{decoder_forward.1} parent=0 // pred_check_branch
    %1830 = sbr.rel (0) target = $region57
  $region56: #{decoder_forward.1} parent=0 // pred_region
    _
  $region57: #{decoder_forward.1} parent=0 // pred_fallthru
    _

</llo_original>
